<compile_context>
chip_gen: v7x
topology: tpu7x:2x2x1
jax: 0.10.0
libtpu: 0.0.40
codegen_flags: <defaults>
</compile_context>

<pallas_src>
import functools

import jax
import jax.numpy as jnp
from jax.experimental import pallas as pl
from jax.experimental.pallas import tpu as pltpu


_VMEM_LIMIT = 48 * 1024 * 1024  # leaves headroom on v7x (64 MiB physical VMEM)


# ----------------------------------------------------------------------------
# Pallas kernels
# ----------------------------------------------------------------------------
def _gelu_tanh(y):
    # TODO(synk): torch.nn.GELU() default is the exact erf GELU; the tanh
    # approximation is used here (EUP-friendly, max abs diff ~1e-3).
    return 0.5 * y * (1.0 + jnp.tanh(0.7978845608028654 * (y + 0.044715 * y * y * y)))


def _ct_ln_gelu_kernel(x_ref, w_ref, b_ref, g_ref, be_ref, o_ref, *, eps):
    """Fused ConvTranspose2d(k=2,s=2) matmul + LayerNorm2d + GELU.

    x_ref : (tm, Cin)        bf16  flattened input pixels
    w_ref : (4, Cin, Cout)   bf16  per-(dy,dx) tap weight, g = dy*2+dx
    b_ref/g_ref/be_ref : (1, Cout) f32  conv bias / LN gamma / LN beta
    o_ref : (tm, 4*Cout)     bf16  columns ordered (dy, dx, co)
    """
    x = x_ref[...]
    pieces = []
    for g in range(4):
        y = jnp.dot(x, w_ref[g], preferred_element_type=jnp.float32) + b_ref[...]
        mu = jnp.mean(y, axis=-1, keepdims=True)
        var = jnp.mean((y - mu) ** 2, axis=-1, keepdims=True)
        yn = (y - mu) * jax.lax.rsqrt(var + eps)          # rsqrt -> EUP slot
        pieces.append(_gelu_tanh(yn * g_ref[...] + be_ref[...]))
    o_ref[...] = jnp.concatenate(pieces, axis=-1).astype(o_ref.dtype)


def _conv3x3_kernel(xa_ref, xb_ref, w_ref, b_ref, o_ref, *, th, w_out):
    """3x3 'same' conv + folded BN + ReLU on one (batch, row-tile).

    xa_ref : (1, th, W+2, Cin)  padded rows [t*th, t*th+th)
    xb_ref : (1, th, W+2, Cin)  padded rows [(t+1)*th, ...) (first 2 = halo)
    w_ref  : (9, Cin, Cout)     BN-folded weights, k = dy*3+dx
    b_ref  : (1, Cout)          BN-folded bias (f32)
    o_ref  : (1, th*W, Cout)    bf16
    """
    cin = xa_ref.shape[-1]
    xw = jnp.concatenate([xa_ref[0], xb_ref[0, :2]], axis=0)   # (th+2, W+2, Cin)
    acc = jnp.zeros((th * w_out, w_ref.shape[-1]), jnp.float32)
    for k in range(9):
        dy, dx = k // 3, k % 3
        xs = xw[dy:dy + th, dx:dx + w_out, :].reshape(th * w_out, cin)
        acc = acc + jnp.dot(xs, w_ref[k], preferred_element_type=jnp.float32)
    y = jnp.maximum(acc + b_ref[...], 0.0)
    o_ref[0] = y.astype(o_ref.dtype)


def _head_kernel(pe_ref, cls_ref, wc_ref, bc_ref, w1a_ref, w1b_ref, b1_ref,
                 w2_ref, b2_ref, o_ref):
    # cls_token_mlp on the single cls token, then finle_mlp on
    # concat([cls_feat, point_embed]) expressed as pe@W1b + cls@W1a.
    cls_feat = jnp.dot(cls_ref[...], wc_ref[...],
                       preferred_element_type=jnp.float32) + bc_ref[...]
    cls_feat = jnp.maximum(cls_feat, 0.0)                      # (1, 16)
    h = jnp.dot(pe_ref[...], w1b_ref[...], preferred_element_type=jnp.float32)
    h = h + jnp.dot(cls_feat, w1a_ref[...], preferred_element_type=jnp.float32)
    h = jnp.maximum(h + b1_ref[...], 0.0)
    o_ref[...] = (jnp.dot(h, w2_ref[...], preferred_element_type=jnp.float32)
                  + b2_ref[...]).astype(o_ref.dtype)


# ----------------------------------------------------------------------------
# Pallas wrappers
# ----------------------------------------------------------------------------
def conv_transpose_ln_gelu(x_nhwc, w_ct, b_ct, ln_g, ln_b, eps=1e-6):
    """ConvTranspose2d(k=2,s=2) + LayerNorm2d + GELU: (B,H,W,Cin)->(B,2H,2W,Cout).

    NOTE: eps=1e-6 matches SAM's LayerNorm2d default.
    """
    B, H, W, Cin = x_nhwc.shape
    Cout = w_ct.shape[1]
    # torch weight (Cin, Cout, 2, 2) -> (4, Cin, Cout) with tap g = dy*2+dx
    w4 = jnp.transpose(w_ct, (2, 3, 0, 1)).reshape(4, Cin, Cout).astype(jnp.bfloat16)
    x = x_nhwc.reshape(B * H * W, Cin).astype(jnp.bfloat16)

    M = B * H * W
    tm = min(1024, ((M + 15) // 16) * 16)          # large M tile, bf16-aligned
    Mp = ((M + tm - 1) // tm) * tm                 # pad M instead of tm=M fallback
    if Mp != M:
        x = jnp.pad(x, ((0, Mp - M), (0, 0)))

    y = pl.pallas_call(
        functools.partial(_ct_ln_gelu_kernel, eps=eps),
        out_shape=jax.ShapeDtypeStruct((Mp, 4 * Cout), jnp.bfloat16),
        grid=(Mp // tm,),
        in_specs=[pl.BlockSpec((tm, Cin), lambda i: (i, 0)),
                  pl.BlockSpec((4, Cin, Cout), lambda i: (0, 0, 0)),
                  pl.BlockSpec((1, Cout), lambda i: (0, 0)),
                  pl.BlockSpec((1, Cout), lambda i: (0, 0)),
                  pl.BlockSpec((1, Cout), lambda i: (0, 0))],
        out_specs=pl.BlockSpec((tm, 4 * Cout), lambda i: (i, 0)),
        compiler_params=pltpu.CompilerParams(
            dimension_semantics=("parallel",),
            vmem_limit_bytes=_VMEM_LIMIT),
    )(x, w4,
      b_ct.reshape(1, Cout).astype(jnp.float32),
      ln_g.reshape(1, Cout).astype(jnp.float32),
      ln_b.reshape(1, Cout).astype(jnp.float32))

    y = y[:M].reshape(B, H, W, 2, 2, Cout)
    # TODO(synk): this pixel-shuffle transpose could be folded into the out
    # BlockSpec with a (B,H,2,W,2,Cout)-factored output layout (free reshape).
    return jnp.transpose(y, (0, 1, 3, 2, 4, 5)).reshape(B, 2 * H, 2 * W, Cout)


def conv3x3_bn_relu(x, w, bn):
    """ConvModule: 3x3 conv ('same', no bias) + folded eval-mode BN + ReLU."""
    B, H, W, Cin = x.shape
    Cout = w.shape[0]                                  # torch layout (Cout,Cin,3,3)
    gamma, beta, mean, var, eps = bn
    scale = gamma / jnp.sqrt(var + eps)
    w9 = jnp.transpose(w, (2, 3, 1, 0)).reshape(9, Cin, Cout)   # (dy,dx,ci,co)
    w9 = (w9 * scale[None, None, :]).astype(jnp.bfloat16)
    b9 = (beta - mean * scale).reshape(1, Cout).astype(jnp.float32)

    th = 16 if H % 16 == 0 else (8 if H % 8 == 0 else H)
    n_tiles = H // th
    # 1 zero halo row/col + extra zero rows so row-block (t+1) always exists.
    hp_total = (n_tiles + 1) * th
    xp = jnp.pad(x.astype(jnp.bfloat16),
                 ((0, 0), (1, hp_total - H - 1), (1, 1), (0, 0)))

    y = pl.pallas_call(
        functools.partial(_conv3x3_kernel, th=th, w_out=W),
        out_shape=jax.ShapeDtypeStruct((B, H * W, Cout), jnp.bfloat16),
        grid=(B, n_tiles),
        in_specs=[pl.BlockSpec((1, th, W + 2, Cin), lambda b, t: (b, t, 0, 0)),
                  pl.BlockSpec((1, th, W + 2, Cin), lambda b, t: (b, t + 1, 0, 0)),
                  pl.BlockSpec((9, Cin, Cout), lambda b, t: (0, 0, 0)),
                  pl.BlockSpec((1, Cout), lambda b, t: (0, 0))],
        out_specs=pl.BlockSpec((1, th * W, Cout), lambda b, t: (b, t, 0)),
        compiler_params=pltpu.CompilerParams(
            dimension_semantics=("parallel", "parallel"),
            vmem_limit_bytes=_VMEM_LIMIT),
    )(xp, xp, w9, b9)
    # TODO(synk): Cout<128 output lanes -> masked stores; a lane-dense
    # (th, W*Cout) out layout would improve store bandwidth further.
    return y.reshape(B, H, W, Cout)


def pallas_head(pe_flat, cls_tok, wc, bc, w1, b1, w2, b2):
    """Fused cls_token_mlp + concat + finle_mlp.  pe_flat:(M,16) -> (M,1)."""
    M, cd = pe_flat.shape
    w1a, w1b = w1[:cd], w1[cd:]           # concat order: [cls_feat, point_embed]
    full = lambda i: (0, 0)
    args = (pe_flat, cls_tok, wc, bc.reshape(1, -1), w1a, w1b,
            b1.reshape(1, -1), w2, b2.reshape(1, 1))
    return pl.pallas_call(
        _head_kernel,
        out_shape=jax.ShapeDtypeStruct((M, 1), jnp.float32),
        grid=(1,),
        in_specs=[pl.BlockSpec(a.shape, full) for a in args],
        out_specs=pl.BlockSpec((M, 1), full),
    )(*args)


# ----------------------------------------------------------------------------
# JAX glue (x2 bilinear resize, point sampling / bilinear point gather)
# ----------------------------------------------------------------------------
def resize_bilinear_x2(x):
    """Bilinear upsample x2, align_corners=False (PyTorch half-pixel)."""
    B, H, W, C = x.shape

    def coords(out_n, in_n):
        s = (jnp.arange(out_n, dtype=jnp.float32) + 0.5) / 2.0 - 0.5
        s = jnp.clip(s, 0.0, in_n - 1.0)
        i0 = jnp.floor(s).astype(jnp.int32)
        i1 = jnp.minimum(i0 + 1, in_n - 1)
        return i0, i1, (s - i0.astype(jnp.float32)).astype(x.dtype)

    y0, y1, wy = coords(2 * H, H)
    x0, x1, wx = coords(2 * W, W)
    rows = (x[:, y0] * (1 - wy)[None, :, None, None]
            + x[:, y1] * wy[None, :, None, None])
    return (rows[:, :, x0] * (1 - wx)[None, None, :, None]
            + rows[:, :, x1] * wx[None, None, :, None])


def sample_points_from_mask(coarse_mask, sam_seg_mask, num_points):
    # TODO(synk): reference helper is not provided in the source; deterministic
    # stand-in picking the first `num_points` foreground pixels (row-major).
    bs, h, w = coarse_mask.shape
    fg = coarse_mask.reshape(bs, h * w) > 0
    idx = jnp.arange(h * w, dtype=jnp.int32)
    score = jnp.where(fg, idx[None, :], h * w + idx[None, :])
    order = jnp.argsort(score, axis=-1)
    point_mask_indices = order[:, :num_points].astype(jnp.int32)     # (bs,P) flat
    ys = point_mask_indices // w
    xs = point_mask_indices % w
    pts = jnp.stack([ys, xs], axis=-1).astype(jnp.float32) * (1024.0 / h)
    return pts, point_mask_indices


def calculate_point_embed(feat_nhwc, point_mask_indices, sam_seg_mask, up_scale=4):
    # TODO(synk): reference helper not provided; reproduces
    # Upsample(x4, bilinear, align_corners=False) followed by a per-point pixel
    # gather, evaluated lazily as a 4-tap bilinear sample of the conv2 output
    # (the full 16H x 16W upsampled map is never materialized).
    B, Hf, Wf, C = feat_nhwc.shape
    mh, mw = sam_seg_mask.shape[1], sam_seg_mask.shape[2]
    ys = (point_mask_indices // mw) * (Hf * up_scale) // mh
    xs = (point_mask_indices % mw) * (Wf * up_scale) // mw

    def src(i_out, n_in):
        s = (i_out.astype(jnp.float32) + 0.5) / up_scale - 0.5
        s = jnp.clip(s, 0.0, n_in - 1.0)
        i0 = jnp.floor(s).astype(jnp.int32)
        i1 = jnp.minimum(i0 + 1, n_in - 1)
        return i0, i1, s - i0.astype(jnp.float32)

    y0, y1, wy = src(ys, Hf)
    x0, x1, wx = src(xs, Wf)
    flat = feat_nhwc.reshape(B, Hf * Wf, C).astype(jnp.float32)
    bidx = jnp.arange(B)[:, None]

    def g(yy, xx):
        return flat[bidx, yy * Wf + xx]                     # (B, P, C)

    wy = wy[..., None]
    wx = wx[..., None]
    top = g(y0, x0) * (1.0 - wx) + g(y0, x1) * wx
    bot = g(y1, x0) * (1.0 - wx) + g(y1, x1) * wx
    return top * (1.0 - wy) + bot * wy


# ----------------------------------------------------------------------------
# DiscriminatorNet
# ----------------------------------------------------------------------------
def init_params(key, emb_dim, sample_points, concat_dim=16):
    c4, c8 = emb_dim // 4, emb_dim // 8
    ks = jax.random.split(key, 12)
    r = lambda k, shp, s=0.1: (jax.random.normal(k, shp, jnp.float32) * s)
    bn = lambda c: (jnp.ones((c,)), jnp.zeros((c,)), jnp.zeros((c,)),
                    jnp.ones((c,)), 1e-5)
    return dict(
        sample_points=sample_points,
        cls_tok=jax.random.normal(ks[0], (1, emb_dim), jnp.float32),  # Embedding(1,D)
        clsmlp_w=r(ks[1], (emb_dim, concat_dim)), clsmlp_b=r(ks[2], (concat_dim,)),
        ct_w=r(ks[3], (emb_dim, c4, 2, 2)), ct_b=r(ks[4], (c4,)),
        ln_g=jnp.ones((c4,)), ln_b=jnp.zeros((c4,)),
        c1_w=r(ks[5], (c8, c4, 3, 3)), c1_bn=bn(c8),
        c2_w=r(ks[6], (concat_dim, c8, 3, 3)), c2_bn=bn(concat_dim),
        f1_w=r(ks[7], (concat_dim * 2, concat_dim)), f1_b=r(ks[8], (concat_dim,)),
        f2_w=r(ks[9], (concat_dim, 1)), f2_b=r(ks[10], (1,)),
    )


def img_embedding_upscaling(params, x_nchw):
    x = jnp.transpose(x_nchw, (0, 2, 3, 1)).astype(jnp.float32)   # NCHW -> NHWC
    y = conv_transpose_ln_gelu(x, params["ct_w"], params["ct_b"],
                               params["ln_g"], params["ln_b"])     # (B,2H,2W,C/4)
    y = conv3x3_bn_relu(y, params["c1_w"], params["c1_bn"])        # (B,2H,2W,C/8)
    y = resize_bilinear_x2(y)                                      # (B,4H,4W,C/8)
    y = conv3x3_bn_relu(y, params["c2_w"], params["c2_bn"])        # (B,4H,4W,16)
    return y   # final x4 Upsample is applied lazily in calculate_point_embed


def discriminator_net_forward(params, coarse_mask, sam_seg_mask, image_embedding):
    bs = image_embedding.shape[0]
    P = params["sample_points"]
    sample_pts, pm_idx = sample_points_from_mask(coarse_mask, sam_seg_mask, P)
    feat = img_embedding_upscaling(params, image_embedding)        # (bs,4H,4W,16)
    pe = calculate_point_embed(feat, pm_idx, sam_seg_mask, up_scale=4)  # (bs,P,16)
    logits = pallas_head(pe.reshape(bs * P, -1).astype(jnp.float32),
                         params["cls_tok"],
                         params["clsmlp_w"], params["clsmlp_b"],
                         params["f1_w"], params["f1_b"],
                         params["f2_w"], params["f2_b"])
    return logits.reshape(bs, P, 1), sample_pts


if __name__ == "__main__":
    key = jax.random.PRNGKey(0)
    emb_dim, num_points, bs, hw_emb = 32, 8, 2, 8
    hw_mask = hw_emb * 16                                          # 128

    kp, ki, km = jax.random.split(key, 3)
    params = init_params(kp, emb_dim, num_points)

    image_embedding = jax.random.normal(ki, (bs, emb_dim, hw_emb, hw_emb), jnp.float32)
    yy, xx = jnp.meshgrid(jnp.arange(hw_mask), jnp.arange(hw_mask), indexing="ij")
    square = ((yy >= 32) & (yy < 96) & (xx >= 32) & (xx < 96)).astype(jnp.float32)
    coarse_mask = jnp.broadcast_to(square, (bs, hw_mask, hw_mask))
    sam_seg_mask = jax.random.randint(km, (bs, hw_mask, hw_mask), 0, 4, jnp.int32)

    logits, sample_pts = discriminator_net_forward(
        params, coarse_mask, sam_seg_mask, image_embedding)
    jax.block_until_ready((logits, sample_pts))
    assert logits.shape == (bs, num_points, 1)
    assert sample_pts.shape == (bs, num_points, 2)
    print("KERNEL_OK")
</pallas_src>

<mosaic_0001>
module attributes {stable_mosaic.version = 11 : i64} {
  func.func @_ct_ln_gelu_kernel(%arg0: i32, %arg1: memref<128x32xbf16, #tpu.memory_space<vmem>>, %arg2: memref<4x32x8xbf16, #tpu.memory_space<vmem>>, %arg3: memref<1x8xf32, #tpu.memory_space<vmem>>, %arg4: memref<1x8xf32, #tpu.memory_space<vmem>>, %arg5: memref<1x8xf32, #tpu.memory_space<vmem>>, %arg6: memref<128x32xbf16, #tpu.memory_space<vmem>>) attributes {dimension_semantics = [#tpu.dimension_semantics<parallel>], iteration_bounds = array<i64: 1>, scalar_prefetch = 0 : i64, scratch_operands = 0 : i64, tpu.core_type = #tpu.core_type<tc>, window_params = [{transform_indices = @transform_0, window_bounds = array<i64: 128, 32>}, {pipeline_mode = #tpu.pipeline_mode<synchronous>, transform_indices = @transform_1, window_bounds = array<i64: 4, 32, 8>}, {pipeline_mode = #tpu.pipeline_mode<synchronous>, transform_indices = @transform_2, window_bounds = array<i64: 1, 8>}, {pipeline_mode = #tpu.pipeline_mode<synchronous>, transform_indices = @transform_3, window_bounds = array<i64: 1, 8>}, {pipeline_mode = #tpu.pipeline_mode<synchronous>, transform_indices = @transform_4, window_bounds = array<i64: 1, 8>}, {transform_indices = @transform_5, window_bounds = array<i64: 128, 32>}]} {
    %c0 = arith.constant 0 : index
    %c0_0 = arith.constant 0 : index
    %0 = vector.load %arg1[%c0, %c0_0] : memref<128x32xbf16, #tpu.memory_space<vmem>>, vector<128x32xbf16>
    %c0_1 = arith.constant 0 : index
    %c0_2 = arith.constant 0 : index
    %c0_3 = arith.constant 0 : index
    %1 = vector.load %arg2[%c0_1, %c0_2, %c0_3] : memref<4x32x8xbf16, #tpu.memory_space<vmem>>, vector<1x32x8xbf16>
    %2 = vector.shape_cast %1 : vector<1x32x8xbf16> to vector<32x8xbf16>
    %cst = arith.constant dense<0.000000e+00> : vector<128x8xf32>
    %3 = tpu.matmul %0, %2, %cst {dimension_numbers = #tpu.dot_dimension_numbers<[1], [0], [0], [1], [0, 0, 1, 1], [], []>} : vector<128x32xbf16>, vector<32x8xbf16>, vector<128x8xf32> -> vector<128x8xf32>
    %c0_4 = arith.constant 0 : index
    %c0_5 = arith.constant 0 : index
    %4 = vector.load %arg3[%c0_4, %c0_5] : memref<1x8xf32, #tpu.memory_space<vmem>>, vector<1x8xf32>
    %5 = vector.broadcast %4 : vector<1x8xf32> to vector<128x8xf32>
    %6 = arith.addf %3, %5 : vector<128x8xf32>
    %cst_6 = arith.constant dense<0.000000e+00> : vector<128xf32>
    %7 = vector.multi_reduction <add>, %6, %cst_6 [1] : vector<128x8xf32> to vector<128xf32>
    %8 = vector.shape_cast %7 : vector<128xf32> to vector<128x1xf32>
    %cst_7 = arith.constant 8.000000e+00 : f32
    %9 = vector.broadcast %cst_7 : f32 to vector<128x1xf32>
    %10 = arith.divf %8, %9 : vector<128x1xf32>
    %11 = vector.broadcast %10 : vector<128x1xf32> to vector<128x8xf32>
    %12 = arith.subf %6, %11 : vector<128x8xf32>
    %13 = arith.mulf %12, %12 : vector<128x8xf32>
    %cst_8 = arith.constant dense<0.000000e+00> : vector<128xf32>
    %14 = vector.multi_reduction <add>, %13, %cst_8 [1] : vector<128x8xf32> to vector<128xf32>
    %15 = vector.shape_cast %14 : vector<128xf32> to vector<128x1xf32>
    %cst_9 = arith.constant 8.000000e+00 : f32
    %16 = vector.broadcast %cst_9 : f32 to vector<128x1xf32>
    %17 = arith.divf %15, %16 : vector<128x1xf32>
    %18 = vector.broadcast %10 : vector<128x1xf32> to vector<128x8xf32>
    %19 = arith.subf %6, %18 : vector<128x8xf32>
    %cst_10 = arith.constant 9.99999997E-7 : f32
    %20 = vector.broadcast %cst_10 : f32 to vector<128x1xf32>
    %21 = arith.addf %17, %20 : vector<128x1xf32>
    %22 = math.rsqrt %21 : vector<128x1xf32>
    %23 = vector.broadcast %22 : vector<128x1xf32> to vector<128x8xf32>
    %24 = arith.mulf %19, %23 : vector<128x8xf32>
    %c0_11 = arith.constant 0 : index
    %c0_12 = arith.constant 0 : index
    %25 = vector.load %arg4[%c0_11, %c0_12] : memref<1x8xf32, #tpu.memory_space<vmem>>, vector<1x8xf32>
    %26 = vector.broadcast %25 : vector<1x8xf32> to vector<128x8xf32>
    %27 = arith.mulf %24, %26 : vector<128x8xf32>
    %c0_13 = arith.constant 0 : index
    %c0_14 = arith.constant 0 : index
    %28 = vector.load %arg5[%c0_13, %c0_14] : memref<1x8xf32, #tpu.memory_space<vmem>>, vector<1x8xf32>
    %29 = vector.broadcast %28 : vector<1x8xf32> to vector<128x8xf32>
    %30 = arith.addf %27, %29 : vector<128x8xf32>
    %cst_15 = arith.constant 5.000000e-01 : f32
    %31 = vector.broadcast %cst_15 : f32 to vector<128x8xf32>
    %32 = arith.mulf %31, %30 : vector<128x8xf32>
    %cst_16 = arith.constant 4.471500e-02 : f32
    %33 = vector.broadcast %cst_16 : f32 to vector<128x8xf32>
    %34 = arith.mulf %33, %30 : vector<128x8xf32>
    %35 = arith.mulf %34, %30 : vector<128x8xf32>
    %36 = arith.mulf %35, %30 : vector<128x8xf32>
    %37 = arith.addf %30, %36 : vector<128x8xf32>
    %cst_17 = arith.constant 0.797884583 : f32
    %38 = vector.broadcast %cst_17 : f32 to vector<128x8xf32>
    %39 = arith.mulf %38, %37 : vector<128x8xf32>
    %40 = math.tanh %39 : vector<128x8xf32>
    %cst_18 = arith.constant 1.000000e+00 : f32
    %41 = vector.broadcast %cst_18 : f32 to vector<128x8xf32>
    %42 = arith.addf %41, %40 : vector<128x8xf32>
    %43 = arith.mulf %32, %42 : vector<128x8xf32>
    %c1 = arith.constant 1 : index
    %c0_19 = arith.constant 0 : index
    %c0_20 = arith.constant 0 : index
    %44 = vector.load %arg2[%c1, %c0_19, %c0_20] : memref<4x32x8xbf16, #tpu.memory_space<vmem>>, vector<1x32x8xbf16>
    %45 = vector.shape_cast %44 : vector<1x32x8xbf16> to vector<32x8xbf16>
    %cst_21 = arith.constant dense<0.000000e+00> : vector<128x8xf32>
    %46 = tpu.matmul %0, %45, %cst_21 {dimension_numbers = #tpu.dot_dimension_numbers<[1], [0], [0], [1], [0, 0, 1, 1], [], []>} : vector<128x32xbf16>, vector<32x8xbf16>, vector<128x8xf32> -> vector<128x8xf32>
    %c0_22 = arith.constant 0 : index
    %c0_23 = arith.constant 0 : index
    %47 = vector.load %arg3[%c0_22, %c0_23] : memref<1x8xf32, #tpu.memory_space<vmem>>, vector<1x8xf32>
    %48 = vector.broadcast %47 : vector<1x8xf32> to vector<128x8xf32>
    %49 = arith.addf %46, %48 : vector<128x8xf32>
    %cst_24 = arith.constant dense<0.000000e+00> : vector<128xf32>
    %50 = vector.multi_reduction <add>, %49, %cst_24 [1] : vector<128x8xf32> to vector<128xf32>
    %51 = vector.shape_cast %50 : vector<128xf32> to vector<128x1xf32>
    %cst_25 = arith.constant 8.000000e+00 : f32
    %52 = vector.broadcast %cst_25 : f32 to vector<128x1xf32>
    %53 = arith.divf %51, %52 : vector<128x1xf32>
    %54 = vector.broadcast %53 : vector<128x1xf32> to vector<128x8xf32>
    %55 = arith.subf %49, %54 : vector<128x8xf32>
    %56 = arith.mulf %55, %55 : vector<128x8xf32>
    %cst_26 = arith.constant dense<0.000000e+00> : vector<128xf32>
    %57 = vector.multi_reduction <add>, %56, %cst_26 [1] : vector<128x8xf32> to vector<128xf32>
    %58 = vector.shape_cast %57 : vector<128xf32> to vector<128x1xf32>
    %cst_27 = arith.constant 8.000000e+00 : f32
    %59 = vector.broadcast %cst_27 : f32 to vector<128x1xf32>
    %60 = arith.divf %58, %59 : vector<128x1xf32>
    %61 = vector.broadcast %53 : vector<128x1xf32> to vector<128x8xf32>
    %62 = arith.subf %49, %61 : vector<128x8xf32>
    %cst_28 = arith.constant 9.99999997E-7 : f32
    %63 = vector.broadcast %cst_28 : f32 to vector<128x1xf32>
    %64 = arith.addf %60, %63 : vector<128x1xf32>
    %65 = math.rsqrt %64 : vector<128x1xf32>
    %66 = vector.broadcast %65 : vector<128x1xf32> to vector<128x8xf32>
    %67 = arith.mulf %62, %66 : vector<128x8xf32>
    %c0_29 = arith.constant 0 : index
    %c0_30 = arith.constant 0 : index
    %68 = vector.load %arg4[%c0_29, %c0_30] : memref<1x8xf32, #tpu.memory_space<vmem>>, vector<1x8xf32>
    %69 = vector.broadcast %68 : vector<1x8xf32> to vector<128x8xf32>
    %70 = arith.mulf %67, %69 : vector<128x8xf32>
    %c0_31 = arith.constant 0 : index
    %c0_32 = arith.constant 0 : index
    %71 = vector.load %arg5[%c0_31, %c0_32] : memref<1x8xf32, #tpu.memory_space<vmem>>, vector<1x8xf32>
    %72 = vector.broadcast %71 : vector<1x8xf32> to vector<128x8xf32>
    %73 = arith.addf %70, %72 : vector<128x8xf32>
    %cst_33 = arith.constant 5.000000e-01 : f32
    %74 = vector.broadcast %cst_33 : f32 to vector<128x8xf32>
    %75 = arith.mulf %74, %73 : vector<128x8xf32>
    %cst_34 = arith.constant 4.471500e-02 : f32
    %76 = vector.broadcast %cst_34 : f32 to vector<128x8xf32>
    %77 = arith.mulf %76, %73 : vector<128x8xf32>
    %78 = arith.mulf %77, %73 : vector<128x8xf32>
    %79 = arith.mulf %78, %73 : vector<128x8xf32>
    %80 = arith.addf %73, %79 : vector<128x8xf32>
    %cst_35 = arith.constant 0.797884583 : f32
    %81 = vector.broadcast %cst_35 : f32 to vector<128x8xf32>
    %82 = arith.mulf %81, %80 : vector<128x8xf32>
    %83 = math.tanh %82 : vector<128x8xf32>
    %cst_36 = arith.constant 1.000000e+00 : f32
    %84 = vector.broadcast %cst_36 : f32 to vector<128x8xf32>
    %85 = arith.addf %84, %83 : vector<128x8xf32>
    %86 = arith.mulf %75, %85 : vector<128x8xf32>
    %c2 = arith.constant 2 : index
    %c0_37 = arith.constant 0 : index
    %c0_38 = arith.constant 0 : index
    %87 = vector.load %arg2[%c2, %c0_37, %c0_38] : memref<4x32x8xbf16, #tpu.memory_space<vmem>>, vector<1x32x8xbf16>
    %88 = vector.shape_cast %87 : vector<1x32x8xbf16> to vector<32x8xbf16>
    %cst_39 = arith.constant dense<0.000000e+00> : vector<128x8xf32>
    %89 = tpu.matmul %0, %88, %cst_39 {dimension_numbers = #tpu.dot_dimension_numbers<[1], [0], [0], [1], [0, 0, 1, 1], [], []>} : vector<128x32xbf16>, vector<32x8xbf16>, vector<128x8xf32> -> vector<128x8xf32>
    %c0_40 = arith.constant 0 : index
    %c0_41 = arith.constant 0 : index
    %90 = vector.load %arg3[%c0_40, %c0_41] : memref<1x8xf32, #tpu.memory_space<vmem>>, vector<1x8xf32>
    %91 = vector.broadcast %90 : vector<1x8xf32> to vector<128x8xf32>
    %92 = arith.addf %89, %91 : vector<128x8xf32>
    %cst_42 = arith.constant dense<0.000000e+00> : vector<128xf32>
    %93 = vector.multi_reduction <add>, %92, %cst_42 [1] : vector<128x8xf32> to vector<128xf32>
    %94 = vector.shape_cast %93 : vector<128xf32> to vector<128x1xf32>
    %cst_43 = arith.constant 8.000000e+00 : f32
    %95 = vector.broadcast %cst_43 : f32 to vector<128x1xf32>
    %96 = arith.divf %94, %95 : vector<128x1xf32>
    %97 = vector.broadcast %96 : vector<128x1xf32> to vector<128x8xf32>
    %98 = arith.subf %92, %97 : vector<128x8xf32>
    %99 = arith.mulf %98, %98 : vector<128x8xf32>
    %cst_44 = arith.constant dense<0.000000e+00> : vector<128xf32>
    %100 = vector.multi_reduction <add>, %99, %cst_44 [1] : vector<128x8xf32> to vector<128xf32>
    %101 = vector.shape_cast %100 : vector<128xf32> to vector<128x1xf32>
    %cst_45 = arith.constant 8.000000e+00 : f32
    %102 = vector.broadcast %cst_45 : f32 to vector<128x1xf32>
    %103 = arith.divf %101, %102 : vector<128x1xf32>
    %104 = vector.broadcast %96 : vector<128x1xf32> to vector<128x8xf32>
    %105 = arith.subf %92, %104 : vector<128x8xf32>
    %cst_46 = arith.constant 9.99999997E-7 : f32
    %106 = vector.broadcast %cst_46 : f32 to vector<128x1xf32>
    %107 = arith.addf %103, %106 : vector<128x1xf32>
    %108 = math.rsqrt %107 : vector<128x1xf32>
    %109 = vector.broadcast %108 : vector<128x1xf32> to vector<128x8xf32>
    %110 = arith.mulf %105, %109 : vector<128x8xf32>
    %c0_47 = arith.constant 0 : index
    %c0_48 = arith.constant 0 : index
    %111 = vector.load %arg4[%c0_47, %c0_48] : memref<1x8xf32, #tpu.memory_space<vmem>>, vector<1x8xf32>
    %112 = vector.broadcast %111 : vector<1x8xf32> to vector<128x8xf32>
    %113 = arith.mulf %110, %112 : vector<128x8xf32>
    %c0_49 = arith.constant 0 : index
    %c0_50 = arith.constant 0 : index
    %114 = vector.load %arg5[%c0_49, %c0_50] : memref<1x8xf32, #tpu.memory_space<vmem>>, vector<1x8xf32>
    %115 = vector.broadcast %114 : vector<1x8xf32> to vector<128x8xf32>
    %116 = arith.addf %113, %115 : vector<128x8xf32>
    %cst_51 = arith.constant 5.000000e-01 : f32
    %117 = vector.broadcast %cst_51 : f32 to vector<128x8xf32>
    %118 = arith.mulf %117, %116 : vector<128x8xf32>
    %cst_52 = arith.constant 4.471500e-02 : f32
    %119 = vector.broadcast %cst_52 : f32 to vector<128x8xf32>
    %120 = arith.mulf %119, %116 : vector<128x8xf32>
    %121 = arith.mulf %120, %116 : vector<128x8xf32>
    %122 = arith.mulf %121, %116 : vector<128x8xf32>
    %123 = arith.addf %116, %122 : vector<128x8xf32>
    %cst_53 = arith.constant 0.797884583 : f32
    %124 = vector.broadcast %cst_53 : f32 to vector<128x8xf32>
    %125 = arith.mulf %124, %123 : vector<128x8xf32>
    %126 = math.tanh %125 : vector<128x8xf32>
    %cst_54 = arith.constant 1.000000e+00 : f32
    %127 = vector.broadcast %cst_54 : f32 to vector<128x8xf32>
    %128 = arith.addf %127, %126 : vector<128x8xf32>
    %129 = arith.mulf %118, %128 : vector<128x8xf32>
    %c3 = arith.constant 3 : index
    %c0_55 = arith.constant 0 : index
    %c0_56 = arith.constant 0 : index
    %130 = vector.load %arg2[%c3, %c0_55, %c0_56] : memref<4x32x8xbf16, #tpu.memory_space<vmem>>, vector<1x32x8xbf16>
    %131 = vector.shape_cast %130 : vector<1x32x8xbf16> to vector<32x8xbf16>
    %cst_57 = arith.constant dense<0.000000e+00> : vector<128x8xf32>
    %132 = tpu.matmul %0, %131, %cst_57 {dimension_numbers = #tpu.dot_dimension_numbers<[1], [0], [0], [1], [0, 0, 1, 1], [], []>} : vector<128x32xbf16>, vector<32x8xbf16>, vector<128x8xf32> -> vector<128x8xf32>
    %c0_58 = arith.constant 0 : index
    %c0_59 = arith.constant 0 : index
    %133 = vector.load %arg3[%c0_58, %c0_59] : memref<1x8xf32, #tpu.memory_space<vmem>>, vector<1x8xf32>
    %134 = vector.broadcast %133 : vector<1x8xf32> to vector<128x8xf32>
    %135 = arith.addf %132, %134 : vector<128x8xf32>
    %cst_60 = arith.constant dense<0.000000e+00> : vector<128xf32>
    %136 = vector.multi_reduction <add>, %135, %cst_60 [1] : vector<128x8xf32> to vector<128xf32>
    %137 = vector.shape_cast %136 : vector<128xf32> to vector<128x1xf32>
    %cst_61 = arith.constant 8.000000e+00 : f32
    %138 = vector.broadcast %cst_61 : f32 to vector<128x1xf32>
    %139 = arith.divf %137, %138 : vector<128x1xf32>
    %140 = vector.broadcast %139 : vector<128x1xf32> to vector<128x8xf32>
    %141 = arith.subf %135, %140 : vector<128x8xf32>
    %142 = arith.mulf %141, %141 : vector<128x8xf32>
    %cst_62 = arith.constant dense<0.000000e+00> : vector<128xf32>
    %143 = vector.multi_reduction <add>, %142, %cst_62 [1] : vector<128x8xf32> to vector<128xf32>
    %144 = vector.shape_cast %143 : vector<128xf32> to vector<128x1xf32>
    %cst_63 = arith.constant 8.000000e+00 : f32
    %145 = vector.broadcast %cst_63 : f32 to vector<128x1xf32>
    %146 = arith.divf %144, %145 : vector<128x1xf32>
    %147 = vector.broadcast %139 : vector<128x1xf32> to vector<128x8xf32>
    %148 = arith.subf %135, %147 : vector<128x8xf32>
    %cst_64 = arith.constant 9.99999997E-7 : f32
    %149 = vector.broadcast %cst_64 : f32 to vector<128x1xf32>
    %150 = arith.addf %146, %149 : vector<128x1xf32>
    %151 = math.rsqrt %150 : vector<128x1xf32>
    %152 = vector.broadcast %151 : vector<128x1xf32> to vector<128x8xf32>
    %153 = arith.mulf %148, %152 : vector<128x8xf32>
    %c0_65 = arith.constant 0 : index
    %c0_66 = arith.constant 0 : index
    %154 = vector.load %arg4[%c0_65, %c0_66] : memref<1x8xf32, #tpu.memory_space<vmem>>, vector<1x8xf32>
    %155 = vector.broadcast %154 : vector<1x8xf32> to vector<128x8xf32>
    %156 = arith.mulf %153, %155 : vector<128x8xf32>
    %c0_67 = arith.constant 0 : index
    %c0_68 = arith.constant 0 : index
    %157 = vector.load %arg5[%c0_67, %c0_68] : memref<1x8xf32, #tpu.memory_space<vmem>>, vector<1x8xf32>
    %158 = vector.broadcast %157 : vector<1x8xf32> to vector<128x8xf32>
    %159 = arith.addf %156, %158 : vector<128x8xf32>
    %cst_69 = arith.constant 5.000000e-01 : f32
    %160 = vector.broadcast %cst_69 : f32 to vector<128x8xf32>
    %161 = arith.mulf %160, %159 : vector<128x8xf32>
    %cst_70 = arith.constant 4.471500e-02 : f32
    %162 = vector.broadcast %cst_70 : f32 to vector<128x8xf32>
    %163 = arith.mulf %162, %159 : vector<128x8xf32>
    %164 = arith.mulf %163, %159 : vector<128x8xf32>
    %165 = arith.mulf %164, %159 : vector<128x8xf32>
    %166 = arith.addf %159, %165 : vector<128x8xf32>
    %cst_71 = arith.constant 0.797884583 : f32
    %167 = vector.broadcast %cst_71 : f32 to vector<128x8xf32>
    %168 = arith.mulf %167, %166 : vector<128x8xf32>
    %169 = math.tanh %168 : vector<128x8xf32>
    %cst_72 = arith.constant 1.000000e+00 : f32
    %170 = vector.broadcast %cst_72 : f32 to vector<128x8xf32>
    %171 = arith.addf %170, %169 : vector<128x8xf32>
    %172 = arith.mulf %161, %171 : vector<128x8xf32>
    %173 = tpu.concatenate %43, %86, %129, %172 in 1 : vector<128x8xf32>, vector<128x8xf32>, vector<128x8xf32>, vector<128x8xf32> -> vector<128x32xf32>
    %174 = arith.truncf %173 : vector<128x32xf32> to vector<128x32xbf16>
    %c0_73 = arith.constant 0 : index
    %c0_74 = arith.constant 0 : index
    %175 = vector.load %arg6[%c0_73, %c0_74] : memref<128x32xbf16, #tpu.memory_space<vmem>>, vector<128x32xbf16>
    tpu.vector_store %arg6[%c0_73, %c0_74], %174 {strides = array<i32>} : memref<128x32xbf16, #tpu.memory_space<vmem>>, vector<128x32xbf16>,
    return
  }
  func.func @transform_0(%arg0: i32) -> (i32, i32) {
    %c0_i32 = arith.constant 0 : i32
    %c0_i32_0 = arith.constant 0 : i32
    return %arg0, %c0_i32 : i32, i32
  }
  func.func @transform_1(%arg0: i32) -> (i32, i32, i32) {
    %c0_i32 = arith.constant 0 : i32
    %c0_i32_0 = arith.constant 0 : i32
    %c0_i32_1 = arith.constant 0 : i32
    %c0_i32_2 = arith.constant 0 : i32
    return %c0_i32, %c0_i32_0, %c0_i32_1 : i32, i32, i32
  }
  func.func @transform_2(%arg0: i32) -> (i32, i32) {
    %c0_i32 = arith.constant 0 : i32
    %c0_i32_0 = arith.constant 0 : i32
    %c0_i32_1 = arith.constant 0 : i32
    return %c0_i32, %c0_i32_0 : i32, i32
  }
  func.func @transform_3(%arg0: i32) -> (i32, i32) {
    %c0_i32 = arith.constant 0 : i32
    %c0_i32_0 = arith.constant 0 : i32
    %c0_i32_1 = arith.constant 0 : i32
    return %c0_i32, %c0_i32_0 : i32, i32
  }
  func.func @transform_4(%arg0: i32) -> (i32, i32) {
    %c0_i32 = arith.constant 0 : i32
    %c0_i32_0 = arith.constant 0 : i32
    %c0_i32_1 = arith.constant 0 : i32
    return %c0_i32, %c0_i32_0 : i32, i32
  }
  func.func @transform_5(%arg0: i32) -> (i32, i32) {
    %c0_i32 = arith.constant 0 : i32
    %c0_i32_0 = arith.constant 0 : i32
    return %arg0, %c0_i32 : i32, i32
  }
}

</mosaic_0001>

<llo_original>
// kernel: tpu_custom_call.1
$region0: #{tpu_custom_call.1}
  #allocation0 [shape = 'u32[]', space=smem, size = 0x4, offset = 0x4, fixed_abs, tag = 'smem constant byte address 0x4 - core index']
  #allocation1 [shape = 'u32[144,128]{1,0:T(1,128)}', space=vmem, size = 0x12000, scoped, tag = 'internal scratch']
  %s0 = inlined_call_operand.vmem [shape: bf16[128,32], index: 0, kind: input, shape index: {}]
  %s1 = inlined_call_operand.vmem [shape: bf16[4,32,8], index: 1, kind: input, shape index: {}]
  %s2 = inlined_call_operand.vmem [shape: f32[1,8], index: 2, kind: input, shape index: {}]
  %s3 = inlined_call_operand.vmem [shape: f32[1,8], index: 3, kind: input, shape index: {}]
  %s4 = inlined_call_operand.vmem [shape: f32[1,8], index: 4, kind: input, shape index: {}]
  %s5 = inlined_call_operand.vmem [shape: bf16[128,32], index: 5, kind: output, shape index: {}]
  %s6 = sld [smem:[#allocation0]]
  $region30: #{tpu_custom_call.1} parent=0
    _
  %s8 = ssub.s32 1, %s6
  %s9 = scalar_select 0, %s8, %s6
  // Predicated region
  $region2: #{tpu_custom_call.1} parent=0 // pred_check
    _
  $region3: #{tpu_custom_call.1} parent=0 // pred_check_branch
    %11 = sbr.rel (0) target = $region5
  $region4: #{tpu_custom_call.1} parent=0 // pred_region
    _
  $region5: #{tpu_custom_call.1} parent=0 // pred_fallthru
    _
  // Predicated region
  $region6: #{tpu_custom_call.1} parent=0 // pred_check
    _
  $region7: #{tpu_custom_call.1} parent=0 // pred_check_branch
    %13 = sbr.rel (0) target = $region9
  $region8: #{tpu_custom_call.1} parent=0 // pred_region
    _
  $region9: #{tpu_custom_call.1} parent=0 // pred_fallthru
    _
  // Predicated region
  $region10: #{tpu_custom_call.1} parent=0 // pred_check
    _
  $region11: #{tpu_custom_call.1} parent=0 // pred_check_branch
    %15 = sbr.rel (0) target = $region13
  $region12: #{tpu_custom_call.1} parent=0 // pred_region
    _
  $region13: #{tpu_custom_call.1} parent=0 // pred_fallthru
    _
  // Predicated region
  $region14: #{tpu_custom_call.1} parent=0 // pred_check
    _
  $region15: #{tpu_custom_call.1} parent=0 // pred_check_branch
    %17 = sbr.rel (0) target = $region17
  $region16: #{tpu_custom_call.1} parent=0 // pred_region
    _
  $region17: #{tpu_custom_call.1} parent=0 // pred_fallthru
    _
  // Predicated region
  $region18: #{tpu_custom_call.1} parent=0 // pred_check
    _
  $region19: #{tpu_custom_call.1} parent=0 // pred_check_branch
    %19 = sbr.rel (0) target = $region21
  $region20: #{tpu_custom_call.1} parent=0 // pred_region
    _
  $region21: #{tpu_custom_call.1} parent=0 // pred_fallthru
    _
  %v21 = vld [vmem:[%s0] sm:$0xf]
  %v22 = vld [vmem:[%s0 + $0x4] sm:$0xf]
  %v23 = vld [vmem:[%s0 + $0x8] sm:$0xf]
  %v24 = vld [vmem:[%s0 + $0xc] sm:$0xf]
  %v25 = vld [vmem:[%s0 + $0x10] sm:$0xf]
  %v26 = vld [vmem:[%s0 + $0x14] sm:$0xf]
  %v27 = vld [vmem:[%s0 + $0x18] sm:$0xf]
  %v28 = vld [vmem:[%s0 + $0x1c] sm:$0xf]
  %v29 = vld [vmem:[%s0 + $0x20] sm:$0xf]
  %v30 = vld [vmem:[%s0 + $0x24] sm:$0xf]
  %v31 = vld [vmem:[%s0 + $0x28] sm:$0xf]
  %v32 = vld [vmem:[%s0 + $0x2c] sm:$0xf]
  %v33 = vld [vmem:[%s0 + $0x30] sm:$0xf]
  %v34 = vld [vmem:[%s0 + $0x34] sm:$0xf]
  %v35 = vld [vmem:[%s0 + $0x38] sm:$0xf]
  %v36 = vld [vmem:[%s0 + $0x3c] sm:$0xf]
  %v37 = vld [vmem:[%s1] sm:$0xf]
  %v38 = vld [vmem:[%s1 + $0x4] sm:$0xf]
  %v39 = vld [vmem:[%s1 + $0x8] sm:$0xf]
  %v40 = vld [vmem:[%s1 + $0xc] sm:$0xf]
  %v41 = vld [vmem:[%s2] sm:$0x1]
  %v43 = vlaneseq
  %v44 = vshrl.u32 %v43, 7
  %v45 = vsub.s32 0, %v44
  %v46 = vrot.slane %v41, %v45
  %v64 = vunpack.c.l.b16 %v21
  %v65 = vunpack.c.l.b16 %v22
  %v66 = vunpack.c.l.b16 %v23
  %v67 = vunpack.c.l.b16 %v24
  %v68 = vunpack.c.l.b16 %v25
  %v69 = vunpack.c.l.b16 %v26
  %v70 = vunpack.c.l.b16 %v27
  %v71 = vunpack.c.l.b16 %v28
  %v72 = vunpack.c.l.b16 %v29
  %v73 = vunpack.c.l.b16 %v30
  %v74 = vunpack.c.l.b16 %v31
  %v75 = vunpack.c.l.b16 %v32
  %v76 = vunpack.c.l.b16 %v33
  %v77 = vunpack.c.l.b16 %v34
  %v78 = vunpack.c.l.b16 %v35
  %v79 = vunpack.c.l.b16 %v36
  %v80 = vpack.c.b16 %v65, %v64
  %v81 = vpack.c.b16 %v67, %v66
  %v82 = vpack.c.b16 %v69, %v68
  %v83 = vpack.c.b16 %v71, %v70
  %v84 = vpack.c.b16 %v73, %v72
  %v85 = vpack.c.b16 %v75, %v74
  %v86 = vpack.c.b16 %v77, %v76
  %v87 = vpack.c.b16 %v79, %v78
  %v92 = vunpack.c.l.b16 %v37
  %v93 = vunpack.c.l.b16 %v38
  %v94 = vunpack.c.l.b16 %v39
  %v95 = vunpack.c.l.b16 %v40
  %v96 = vpack.c.b16 %v93, %v92
  %v97 = vpack.c.b16 %v95, %v94
  %vm100 = vcmask 261120
  %v102 = vsel %vm100, %v80, 0
  %v105 = vsel %vm100, %v81, 0
  %v108 = vsel %vm100, %v82, 0
  %v111 = vsel %vm100, %v83, 0
  %v114 = vsel %vm100, %v84, 0
  %v117 = vsel %vm100, %v85, 0
  %v120 = vsel %vm100, %v86, 0
  %v123 = vsel %vm100, %v87, 0
  %125 = vmatprep.subr.bf16.mxu0 0
  %126 = vmatpush1.bf16.msra.mxu0 %v96
  %127 = vmatprep.subr.bf16.mxu0 0
  %128 = vmatpush1.bf16.msra.mxu0 %v97
  %129 = vmatprep.subr.bf16.mxu0 0
  %130 = vmatpush1.bf16.msra.mxu0 0
  %131 = vmatprep.subr.bf16.mxu0 0
  %132 = vmatpush1.bf16.msra.mxu0 0
  %133 = vmatprep.subr.bf16.mxu0 0
  %134 = vmatpush1.bf16.msra.mxu0 0
  %135 = vmatprep.subr.bf16.mxu0 0
  %136 = vmatpush1.bf16.msra.mxu0 0
  %137 = vmatprep.subr.bf16.mxu0 0
  %138 = vmatpush1.bf16.msra.mxu0 0
  %139 = vmatprep.subr.bf16.mxu0 0
  %140 = vmatpush1.bf16.msra.mxu0 0
  %141 = vmatprep.subr.bf16.mxu0 0
  %142 = vmatpush1.bf16.msra.mxu0 0
  %143 = vmatprep.subr.bf16.mxu0 0
  %144 = vmatpush1.bf16.msra.mxu0 0
  %145 = vmatprep.subr.bf16.mxu0 0
  %146 = vmatpush1.bf16.msra.mxu0 0
  %147 = vmatprep.subr.bf16.mxu0 0
  %148 = vmatpush1.bf16.msra.mxu0 0
  %149 = vmatprep.subr.bf16.mxu0 0
  %150 = vmatpush1.bf16.msra.mxu0 0
  %151 = vmatprep.subr.bf16.mxu0 0
  %152 = vmatpush1.bf16.msra.mxu0 0
  %153 = vmatprep.subr.bf16.mxu0 0
  %154 = vmatpush1.bf16.msra.mxu0 0
  %155 = vmatprep.subr.bf16.mxu0 0
  %156 = vmatpush1.bf16.msra.mxu0 0
  %157 = vmatprep.mubr.bf16.mxu0 0
  %158 = vmatmul.mubr.bf16.gmra.mrb[0].mxu0 %v102
  %v159 = vpop.f32.mrb[0].mxu0
  %v160 = vadd.f32 %v46, %v159
  %v161 = vpop.f32.mrb[0].mxu0
  %v162 = vpop.f32.mrb[0].mxu0
  %v163 = vadd.f32 %v46, %v162
  %v164 = vpop.f32.mrb[0].mxu0
  %165 = vmatprep.mubr.bf16.mxu0 0
  %166 = vmatmul.mubr.bf16.gmra.mrb[0].mxu0 %v105
  %v167 = vpop.f32.mrb[0].mxu0
  %v168 = vadd.f32 %v46, %v167
  %v169 = vpop.f32.mrb[0].mxu0
  %v170 = vpop.f32.mrb[0].mxu0
  %v171 = vadd.f32 %v46, %v170
  %v172 = vpop.f32.mrb[0].mxu0
  %173 = vmatprep.mubr.bf16.mxu0 0
  %174 = vmatmul.mubr.bf16.gmra.mrb[0].mxu0 %v108
  %v175 = vpop.f32.mrb[0].mxu0
  %v176 = vadd.f32 %v46, %v175
  %v177 = vpop.f32.mrb[0].mxu0
  %v178 = vpop.f32.mrb[0].mxu0
  %v179 = vadd.f32 %v46, %v178
  %v180 = vpop.f32.mrb[0].mxu0
  %181 = vmatprep.mubr.bf16.mxu0 0
  %182 = vmatmul.mubr.bf16.gmra.mrb[0].mxu0 %v111
  %v183 = vpop.f32.mrb[0].mxu0
  %v184 = vadd.f32 %v46, %v183
  %v185 = vpop.f32.mrb[0].mxu0
  %v186 = vpop.f32.mrb[0].mxu0
  %v187 = vadd.f32 %v46, %v186
  %v188 = vpop.f32.mrb[0].mxu0
  %189 = vmatprep.mubr.bf16.mxu0 0
  %190 = vmatmul.mubr.bf16.gmra.mrb[0].mxu0 %v114
  %v191 = vpop.f32.mrb[0].mxu0
  %v192 = vadd.f32 %v46, %v191
  %v193 = vpop.f32.mrb[0].mxu0
  %v194 = vpop.f32.mrb[0].mxu0
  %v195 = vadd.f32 %v46, %v194
  %v196 = vpop.f32.mrb[0].mxu0
  %197 = vmatprep.mubr.bf16.mxu0 0
  %198 = vmatmul.mubr.bf16.gmra.mrb[0].mxu0 %v117
  %v199 = vpop.f32.mrb[0].mxu0
  %v200 = vadd.f32 %v46, %v199
  %v201 = vpop.f32.mrb[0].mxu0
  %v202 = vpop.f32.mrb[0].mxu0
  %v203 = vadd.f32 %v46, %v202
  %v204 = vpop.f32.mrb[0].mxu0
  %205 = vmatprep.mubr.bf16.mxu0 0
  %206 = vmatmul.mubr.bf16.gmra.mrb[0].mxu0 %v120
  %v207 = vpop.f32.mrb[0].mxu0
  %v208 = vadd.f32 %v46, %v207
  %v209 = vpop.f32.mrb[0].mxu0
  %v210 = vpop.f32.mrb[0].mxu0
  %v211 = vadd.f32 %v46, %v210
  %v212 = vpop.f32.mrb[0].mxu0
  %213 = vmatprep.mubr.bf16.mxu0 0
  %214 = vmatmul.mubr.bf16.gmra.mrb[0].mxu0 %v123
  %v215 = vpop.f32.mrb[0].mxu0
  %v216 = vadd.f32 %v46, %v215
  %v217 = vpop.f32.mrb[0].mxu0
  %v218 = vpop.f32.mrb[0].mxu0
  %v219 = vadd.f32 %v46, %v218
  %v220 = vpop.f32.mrb[0].mxu0
  %221 = vdwg.mxu0
  %vm222 = vcmask 64512
  %v223 = vsel %vm222, %v160, 0.0
  %224 = vadd.xlane.f32.xlu0 %v223
  %v225 = vpop.xlane.xlu0 %224
  %v226 = vsel %vm222, %v163, 0.0
  %227 = vadd.xlane.f32.xlu0 %v226
  %v228 = vpop.xlane.xlu0 %227
  %v229 = vsel %vm222, %v168, 0.0
  %230 = vadd.xlane.f32.xlu0 %v229
  %v231 = vpop.xlane.xlu0 %230
  %v232 = vsel %vm222, %v171, 0.0
  %233 = vadd.xlane.f32.xlu0 %v232
  %v234 = vpop.xlane.xlu0 %233
  %v235 = vsel %vm222, %v176, 0.0
  %236 = vadd.xlane.f32.xlu0 %v235
  %v237 = vpop.xlane.xlu0 %236
  %v238 = vsel %vm222, %v179, 0.0
  %239 = vadd.xlane.f32.xlu0 %v238
  %v240 = vpop.xlane.xlu0 %239
  %v241 = vsel %vm222, %v184, 0.0
  %242 = vadd.xlane.f32.xlu0 %v241
  %v243 = vpop.xlane.xlu0 %242
  %v244 = vsel %vm222, %v187, 0.0
  %245 = vadd.xlane.f32.xlu0 %v244
  %v246 = vpop.xlane.xlu0 %245
  %v247 = vsel %vm222, %v192, 0.0
  %248 = vadd.xlane.f32.xlu0 %v247
  %v249 = vpop.xlane.xlu0 %248
  %v250 = vsel %vm222, %v195, 0.0
  %251 = vadd.xlane.f32.xlu0 %v250
  %v252 = vpop.xlane.xlu0 %251
  %v253 = vsel %vm222, %v200, 0.0
  %254 = vadd.xlane.f32.xlu0 %v253
  %v255 = vpop.xlane.xlu0 %254
  %v256 = vsel %vm222, %v203, 0.0
  %257 = vadd.xlane.f32.xlu0 %v256
  %v258 = vpop.xlane.xlu0 %257
  %v259 = vsel %vm222, %v208, 0.0
  %260 = vadd.xlane.f32.xlu0 %v259
  %v261 = vpop.xlane.xlu0 %260
  %v262 = vsel %vm222, %v211, 0.0
  %263 = vadd.xlane.f32.xlu0 %v262
  %v264 = vpop.xlane.xlu0 %263
  %v265 = vsel %vm222, %v216, 0.0
  %266 = vadd.xlane.f32.xlu0 %v265
  %v267 = vpop.xlane.xlu0 %266
  %v268 = vsel %vm222, %v219, 0.0
  %269 = vadd.xlane.f32.xlu0 %v268
  %v270 = vpop.xlane.xlu0 %269
  %v271 = vrcp.pop 8.0
  %v272 = vmul.f32 %v225, %v271
  %v273 = vmul.f32 %v228, %v271
  %v274 = vmul.f32 %v231, %v271
  %v275 = vmul.f32 %v234, %v271
  %v276 = vmul.f32 %v237, %v271
  %v277 = vmul.f32 %v240, %v271
  %v278 = vmul.f32 %v243, %v271
  %v279 = vmul.f32 %v246, %v271
  %v280 = vmul.f32 %v249, %v271
  %v281 = vmul.f32 %v252, %v271
  %v282 = vmul.f32 %v255, %v271
  %v283 = vmul.f32 %v258, %v271
  %v284 = vmul.f32 %v261, %v271
  %v285 = vmul.f32 %v264, %v271
  %v286 = vmul.f32 %v267, %v271
  %v287 = vmul.f32 %v270, %v271
  %v288 = vsub.f32 %v160, %v272
  %v289 = vsub.f32 %v163, %v273
  %v290 = vsub.f32 %v168, %v274
  %v291 = vsub.f32 %v171, %v275
  %v292 = vsub.f32 %v176, %v276
  %v293 = vsub.f32 %v179, %v277
  %v294 = vsub.f32 %v184, %v278
  %v295 = vsub.f32 %v187, %v279
  %v296 = vsub.f32 %v192, %v280
  %v297 = vsub.f32 %v195, %v281
  %v298 = vsub.f32 %v200, %v282
  %v299 = vsub.f32 %v203, %v283
  %v300 = vsub.f32 %v208, %v284
  %v301 = vsub.f32 %v211, %v285
  %v302 = vsub.f32 %v216, %v286
  %v303 = vsub.f32 %v219, %v287
  %v304 = vmul.f32 %v288, %v288
  %v305 = vmul.f32 %v289, %v289
  %v306 = vmul.f32 %v290, %v290
  %v307 = vmul.f32 %v291, %v291
  %v308 = vmul.f32 %v292, %v292
  %v309 = vmul.f32 %v293, %v293
  %v310 = vmul.f32 %v294, %v294
  %v311 = vmul.f32 %v295, %v295
  %v312 = vmul.f32 %v296, %v296
  %v313 = vmul.f32 %v297, %v297
  %v314 = vmul.f32 %v298, %v298
  %v315 = vmul.f32 %v299, %v299
  %v316 = vmul.f32 %v300, %v300
  %v317 = vmul.f32 %v301, %v301
  %v318 = vmul.f32 %v302, %v302
  %v319 = vmul.f32 %v303, %v303
  %v320 = vsel %vm222, %v304, 0.0
  %321 = vadd.xlane.f32.xlu0 %v320
  %v322 = vpop.xlane.xlu0 %321
  %v323 = vsel %vm222, %v305, 0.0
  %324 = vadd.xlane.f32.xlu0 %v323
  %v325 = vpop.xlane.xlu0 %324
  %v326 = vsel %vm222, %v306, 0.0
  %327 = vadd.xlane.f32.xlu0 %v326
  %v328 = vpop.xlane.xlu0 %327
  %v329 = vsel %vm222, %v307, 0.0
  %330 = vadd.xlane.f32.xlu0 %v329
  %v331 = vpop.xlane.xlu0 %330
  %v332 = vsel %vm222, %v308, 0.0
  %333 = vadd.xlane.f32.xlu0 %v332
  %v334 = vpop.xlane.xlu0 %333
  %v335 = vsel %vm222, %v309, 0.0
  %336 = vadd.xlane.f32.xlu0 %v335
  %v337 = vpop.xlane.xlu0 %336
  %v338 = vsel %vm222, %v310, 0.0
  %339 = vadd.xlane.f32.xlu0 %v338
  %v340 = vpop.xlane.xlu0 %339
  %v341 = vsel %vm222, %v311, 0.0
  %342 = vadd.xlane.f32.xlu0 %v341
  %v343 = vpop.xlane.xlu0 %342
  %v344 = vsel %vm222, %v312, 0.0
  %345 = vadd.xlane.f32.xlu0 %v344
  %v346 = vpop.xlane.xlu0 %345
  %v347 = vsel %vm222, %v313, 0.0
  %348 = vadd.xlane.f32.xlu0 %v347
  %v349 = vpop.xlane.xlu0 %348
  %v350 = vsel %vm222, %v314, 0.0
  %351 = vadd.xlane.f32.xlu0 %v350
  %v352 = vpop.xlane.xlu0 %351
  %v353 = vsel %vm222, %v315, 0.0
  %354 = vadd.xlane.f32.xlu0 %v353
  %v355 = vpop.xlane.xlu0 %354
  %v356 = vsel %vm222, %v316, 0.0
  %357 = vadd.xlane.f32.xlu0 %v356
  %v358 = vpop.xlane.xlu0 %357
  %v359 = vsel %vm222, %v317, 0.0
  %360 = vadd.xlane.f32.xlu0 %v359
  %v361 = vpop.xlane.xlu0 %360
  %v362 = vsel %vm222, %v318, 0.0
  %363 = vadd.xlane.f32.xlu0 %v362
  %v364 = vpop.xlane.xlu0 %363
  %v365 = vsel %vm222, %v319, 0.0
  %366 = vadd.xlane.f32.xlu0 %v365
  %v367 = vpop.xlane.xlu0 %366
  %v368 = vmul.f32 %v322, %v271
  %v369 = vmul.f32 %v325, %v271
  %v370 = vmul.f32 %v328, %v271
  %v371 = vmul.f32 %v331, %v271
  %v372 = vmul.f32 %v334, %v271
  %v373 = vmul.f32 %v337, %v271
  %v374 = vmul.f32 %v340, %v271
  %v375 = vmul.f32 %v343, %v271
  %v376 = vmul.f32 %v346, %v271
  %v377 = vmul.f32 %v349, %v271
  %v378 = vmul.f32 %v352, %v271
  %v379 = vmul.f32 %v355, %v271
  %v380 = vmul.f32 %v358, %v271
  %v381 = vmul.f32 %v361, %v271
  %v382 = vmul.f32 %v364, %v271
  %v383 = vmul.f32 %v367, %v271
  %v384 = vadd.f32 %v368, 1e-06
  %v385 = vadd.f32 %v369, 1e-06
  %v386 = vadd.f32 %v370, 1e-06
  %v387 = vadd.f32 %v371, 1e-06
  %v388 = vadd.f32 %v372, 1e-06
  %v389 = vadd.f32 %v373, 1e-06
  %v390 = vadd.f32 %v374, 1e-06
  %v391 = vadd.f32 %v375, 1e-06
  %v392 = vadd.f32 %v376, 1e-06
  %v393 = vadd.f32 %v377, 1e-06
  %v394 = vadd.f32 %v378, 1e-06
  %v395 = vadd.f32 %v379, 1e-06
  %v396 = vadd.f32 %v380, 1e-06
  %v397 = vadd.f32 %v381, 1e-06
  %v398 = vadd.f32 %v382, 1e-06
  %v399 = vadd.f32 %v383, 1e-06
  %v400 = vrsqrt.pop %v384
  %v401 = vrsqrt.pop %v385
  %v402 = vrsqrt.pop %v386
  %v403 = vrsqrt.pop %v387
  %v404 = vrsqrt.pop %v388
  %v405 = vrsqrt.pop %v389
  %v406 = vrsqrt.pop %v390
  %v407 = vrsqrt.pop %v391
  %v408 = vrsqrt.pop %v392
  %v409 = vrsqrt.pop %v393
  %v410 = vrsqrt.pop %v394
  %v411 = vrsqrt.pop %v395
  %v412 = vrsqrt.pop %v396
  %v413 = vrsqrt.pop %v397
  %v414 = vrsqrt.pop %v398
  %v415 = vrsqrt.pop %v399
  %v416 = vmul.f32 %v288, %v400
  %v417 = vmul.f32 %v289, %v401
  %v418 = vmul.f32 %v290, %v402
  %v419 = vmul.f32 %v291, %v403
  %v420 = vmul.f32 %v292, %v404
  %v421 = vmul.f32 %v293, %v405
  %v422 = vmul.f32 %v294, %v406
  %v423 = vmul.f32 %v295, %v407
  %v424 = vmul.f32 %v296, %v408
  %v425 = vmul.f32 %v297, %v409
  %v426 = vmul.f32 %v298, %v410
  %v427 = vmul.f32 %v299, %v411
  %v428 = vmul.f32 %v300, %v412
  %v429 = vmul.f32 %v301, %v413
  %v430 = vmul.f32 %v302, %v414
  %v431 = vmul.f32 %v303, %v415
  %v432 = vld [vmem:[%s3] sm:$0x1]
  %v434 = vlaneseq
  %v435 = vshrl.u32 %v434, 7
  %v436 = vsub.s32 0, %v435
  %v437 = vrot.slane %v432, %v436
  %v439 = vmul.f32 %v416, %v437
  %v440 = vmul.f32 %v417, %v437
  %v441 = vmul.f32 %v418, %v437
  %v442 = vmul.f32 %v419, %v437
  %v443 = vmul.f32 %v420, %v437
  %v444 = vmul.f32 %v421, %v437
  %v445 = vmul.f32 %v422, %v437
  %v446 = vmul.f32 %v423, %v437
  %v447 = vmul.f32 %v424, %v437
  %v448 = vmul.f32 %v425, %v437
  %v449 = vmul.f32 %v426, %v437
  %v450 = vmul.f32 %v427, %v437
  %v451 = vmul.f32 %v428, %v437
  %v452 = vmul.f32 %v429, %v437
  %v453 = vmul.f32 %v430, %v437
  %v454 = vmul.f32 %v431, %v437
  %v455 = vld [vmem:[%s4] sm:$0x1]
  %v457 = vlaneseq
  %v458 = vshrl.u32 %v457, 7
  %v459 = vsub.s32 0, %v458
  %v460 = vrot.slane %v455, %v459
  %v462 = vadd.f32 %v439, %v460
  %v463 = vadd.f32 %v440, %v460
  %v464 = vadd.f32 %v441, %v460
  %v465 = vadd.f32 %v442, %v460
  %v466 = vadd.f32 %v443, %v460
  %v467 = vadd.f32 %v444, %v460
  %v468 = vadd.f32 %v445, %v460
  %v469 = vadd.f32 %v446, %v460
  %v470 = vadd.f32 %v447, %v460
  %v471 = vadd.f32 %v448, %v460
  %v472 = vadd.f32 %v449, %v460
  %v473 = vadd.f32 %v450, %v460
  %v474 = vadd.f32 %v451, %v460
  %v475 = vadd.f32 %v452, %v460
  %v476 = vadd.f32 %v453, %v460
  %v477 = vadd.f32 %v454, %v460
  %v478 = vmul.f32 %v462, 0.5
  %v479 = vmul.f32 %v463, 0.5
  %v480 = vmul.f32 %v464, 0.5
  %v481 = vmul.f32 %v465, 0.5
  %v482 = vmul.f32 %v466, 0.5
  %v483 = vmul.f32 %v467, 0.5
  %v484 = vmul.f32 %v468, 0.5
  %v485 = vmul.f32 %v469, 0.5
  %v486 = vmul.f32 %v470, 0.5
  %v487 = vmul.f32 %v471, 0.5
  %v488 = vmul.f32 %v472, 0.5
  %v489 = vmul.f32 %v473, 0.5
  %v490 = vmul.f32 %v474, 0.5
  %v491 = vmul.f32 %v475, 0.5
  %v492 = vmul.f32 %v476, 0.5
  %v493 = vmul.f32 %v477, 0.5
  %v494 = vmul.f32 %v462, 0.044715
  %v495 = vmul.f32 %v463, 0.044715
  %v496 = vmul.f32 %v464, 0.044715
  %v497 = vmul.f32 %v465, 0.044715
  %v498 = vmul.f32 %v466, 0.044715
  %v499 = vmul.f32 %v467, 0.044715
  %v500 = vmul.f32 %v468, 0.044715
  %v501 = vmul.f32 %v469, 0.044715
  %v502 = vmul.f32 %v470, 0.044715
  %v503 = vmul.f32 %v471, 0.044715
  %v504 = vmul.f32 %v472, 0.044715
  %v505 = vmul.f32 %v473, 0.044715
  %v506 = vmul.f32 %v474, 0.044715
  %v507 = vmul.f32 %v475, 0.044715
  %v508 = vmul.f32 %v476, 0.044715
  %v509 = vmul.f32 %v477, 0.044715
  %v510 = vmul.f32 %v494, %v462
  %v511 = vmul.f32 %v495, %v463
  %v512 = vmul.f32 %v496, %v464
  %v513 = vmul.f32 %v497, %v465
  %v514 = vmul.f32 %v498, %v466
  %v515 = vmul.f32 %v499, %v467
  %v516 = vmul.f32 %v500, %v468
  %v517 = vmul.f32 %v501, %v469
  %v518 = vmul.f32 %v502, %v470
  %v519 = vmul.f32 %v503, %v471
  %v520 = vmul.f32 %v504, %v472
  %v521 = vmul.f32 %v505, %v473
  %v522 = vmul.f32 %v506, %v474
  %v523 = vmul.f32 %v507, %v475
  %v524 = vmul.f32 %v508, %v476
  %v525 = vmul.f32 %v509, %v477
  %v526 = vmul.f32 %v510, %v462
  %v527 = vmul.f32 %v511, %v463
  %v528 = vmul.f32 %v512, %v464
  %v529 = vmul.f32 %v513, %v465
  %v530 = vmul.f32 %v514, %v466
  %v531 = vmul.f32 %v515, %v467
  %v532 = vmul.f32 %v516, %v468
  %v533 = vmul.f32 %v517, %v469
  %v534 = vmul.f32 %v518, %v470
  %v535 = vmul.f32 %v519, %v471
  %v536 = vmul.f32 %v520, %v472
  %v537 = vmul.f32 %v521, %v473
  %v538 = vmul.f32 %v522, %v474
  %v539 = vmul.f32 %v523, %v475
  %v540 = vmul.f32 %v524, %v476
  %v541 = vmul.f32 %v525, %v477
  %v542 = vadd.f32 %v462, %v526
  %v543 = vadd.f32 %v463, %v527
  %v544 = vadd.f32 %v464, %v528
  %v545 = vadd.f32 %v465, %v529
  %v546 = vadd.f32 %v466, %v530
  %v547 = vadd.f32 %v467, %v531
  %v548 = vadd.f32 %v468, %v532
  %v549 = vadd.f32 %v469, %v533
  %v550 = vadd.f32 %v470, %v534
  %v551 = vadd.f32 %v471, %v535
  %v552 = vadd.f32 %v472, %v536
  %v553 = vadd.f32 %v473, %v537
  %v554 = vadd.f32 %v474, %v538
  %v555 = vadd.f32 %v475, %v539
  %v556 = vadd.f32 %v476, %v540
  %v557 = vadd.f32 %v477, %v541
  %v558 = vmul.f32 %v542, 0.7978846
  %v559 = vmul.f32 %v543, 0.7978846
  %v560 = vmul.f32 %v544, 0.7978846
  %v561 = vmul.f32 %v545, 0.7978846
  %v562 = vmul.f32 %v546, 0.7978846
  %v563 = vmul.f32 %v547, 0.7978846
  %v564 = vmul.f32 %v548, 0.7978846
  %v565 = vmul.f32 %v549, 0.7978846
  %v566 = vmul.f32 %v550, 0.7978846
  %v567 = vmul.f32 %v551, 0.7978846
  %v568 = vmul.f32 %v552, 0.7978846
  %v569 = vmul.f32 %v553, 0.7978846
  %v570 = vmul.f32 %v554, 0.7978846
  %v571 = vmul.f32 %v555, 0.7978846
  %v572 = vmul.f32 %v556, 0.7978846
  %v573 = vmul.f32 %v557, 0.7978846
  %v574 = vtanh.pop %v558
  %v575 = vtanh.pop %v559
  %v576 = vtanh.pop %v560
  %v577 = vtanh.pop %v561
  %v578 = vtanh.pop %v562
  %v579 = vtanh.pop %v563
  %v580 = vtanh.pop %v564
  %v581 = vtanh.pop %v565
  %v582 = vtanh.pop %v566
  %v583 = vtanh.pop %v567
  %v584 = vtanh.pop %v568
  %v585 = vtanh.pop %v569
  %v586 = vtanh.pop %v570
  %v587 = vtanh.pop %v571
  %v588 = vtanh.pop %v572
  %v589 = vtanh.pop %v573
  %v590 = vadd.f32 %v574, 1.0
  %v591 = vadd.f32 %v575, 1.0
  %v592 = vadd.f32 %v576, 1.0
  %v593 = vadd.f32 %v577, 1.0
  %v594 = vadd.f32 %v578, 1.0
  %v595 = vadd.f32 %v579, 1.0
  %v596 = vadd.f32 %v580, 1.0
  %v597 = vadd.f32 %v581, 1.0
  %v598 = vadd.f32 %v582, 1.0
  %v599 = vadd.f32 %v583, 1.0
  %v600 = vadd.f32 %v584, 1.0
  %v601 = vadd.f32 %v585, 1.0
  %v602 = vadd.f32 %v586, 1.0
  %v603 = vadd.f32 %v587, 1.0
  %v604 = vadd.f32 %v588, 1.0
  %v605 = vadd.f32 %v589, 1.0
  %v606 = vmul.f32 %v478, %v590
  %v607 = vmul.f32 %v479, %v591
  %v608 = vmul.f32 %v480, %v592
  %v609 = vmul.f32 %v481, %v593
  %v610 = vmul.f32 %v482, %v594
  %v611 = vmul.f32 %v483, %v595
  %v612 = vmul.f32 %v484, %v596
  %v613 = vmul.f32 %v485, %v597
  %v614 = vmul.f32 %v486, %v598
  %v615 = vmul.f32 %v487, %v599
  %v616 = vmul.f32 %v488, %v600
  %v617 = vmul.f32 %v489, %v601
  %v618 = vmul.f32 %v490, %v602
  %v619 = vmul.f32 %v491, %v603
  %v620 = vmul.f32 %v492, %v604
  %v621 = vmul.f32 %v493, %v605
  %s622 = scalar_lea.vmem %s1, 16
  %v623 = vld [vmem:[%s622] sm:$0xf]
  %v624 = vld [vmem:[%s622 + $0x4] sm:$0xf]
  %v625 = vld [vmem:[%s622 + $0x8] sm:$0xf]
  %v626 = vld [vmem:[%s622 + $0xc] sm:$0xf]
  %v631 = vunpack.c.l.b16 %v623
  %v632 = vunpack.c.l.b16 %v624
  %v633 = vunpack.c.l.b16 %v625
  %v634 = vunpack.c.l.b16 %v626
  %v635 = vpack.c.b16 %v632, %v631
  %v636 = vpack.c.b16 %v634, %v633
  %639 = vmatprep.subr.bf16.mxu0 0
  %640 = vmatpush1.bf16.msra.mxu0 %v635
  %641 = vmatprep.subr.bf16.mxu0 0
  %642 = vmatpush1.bf16.msra.mxu0 %v636
  %643 = vmatprep.subr.bf16.mxu0 0
  %644 = vmatpush1.bf16.msra.mxu0 0
  %645 = vmatprep.subr.bf16.mxu0 0
  %646 = vmatpush1.bf16.msra.mxu0 0
  %647 = vmatprep.subr.bf16.mxu0 0
  %648 = vmatpush1.bf16.msra.mxu0 0
  %649 = vmatprep.subr.bf16.mxu0 0
  %650 = vmatpush1.bf16.msra.mxu0 0
  %651 = vmatprep.subr.bf16.mxu0 0
  %652 = vmatpush1.bf16.msra.mxu0 0
  %653 = vmatprep.subr.bf16.mxu0 0
  %654 = vmatpush1.bf16.msra.mxu0 0
  %655 = vmatprep.subr.bf16.mxu0 0
  %656 = vmatpush1.bf16.msra.mxu0 0
  %657 = vmatprep.subr.bf16.mxu0 0
  %658 = vmatpush1.bf16.msra.mxu0 0
  %659 = vmatprep.subr.bf16.mxu0 0
  %660 = vmatpush1.bf16.msra.mxu0 0
  %661 = vmatprep.subr.bf16.mxu0 0
  %662 = vmatpush1.bf16.msra.mxu0 0
  %663 = vmatprep.subr.bf16.mxu0 0
  %664 = vmatpush1.bf16.msra.mxu0 0
  %665 = vmatprep.subr.bf16.mxu0 0
  %666 = vmatpush1.bf16.msra.mxu0 0
  %667 = vmatprep.subr.bf16.mxu0 0
  %668 = vmatpush1.bf16.msra.mxu0 0
  %669 = vmatprep.subr.bf16.mxu0 0
  %670 = vmatpush1.bf16.msra.mxu0 0
  %671 = vmatprep.mubr.bf16.mxu0 0
  %672 = vmatmul.mubr.bf16.gmra.mrb[0].mxu0 %v102
  %v673 = vpop.f32.mrb[0].mxu0
  %v674 = vadd.f32 %v46, %v673
  %v675 = vpop.f32.mrb[0].mxu0
  %v676 = vpop.f32.mrb[0].mxu0
  %v677 = vadd.f32 %v46, %v676
  %v678 = vpop.f32.mrb[0].mxu0
  %679 = vmatprep.mubr.bf16.mxu0 0
  %680 = vmatmul.mubr.bf16.gmra.mrb[0].mxu0 %v105
  %v681 = vpop.f32.mrb[0].mxu0
  %v682 = vadd.f32 %v46, %v681
  %v683 = vpop.f32.mrb[0].mxu0
  %v684 = vpop.f32.mrb[0].mxu0
  %v685 = vadd.f32 %v46, %v684
  %v686 = vpop.f32.mrb[0].mxu0
  %687 = vmatprep.mubr.bf16.mxu0 0
  %688 = vmatmul.mubr.bf16.gmra.mrb[0].mxu0 %v108
  %v689 = vpop.f32.mrb[0].mxu0
  %v690 = vadd.f32 %v46, %v689
  %v691 = vpop.f32.mrb[0].mxu0
  %v692 = vpop.f32.mrb[0].mxu0
  %v693 = vadd.f32 %v46, %v692
  %v694 = vpop.f32.mrb[0].mxu0
  %695 = vmatprep.mubr.bf16.mxu0 0
  %696 = vmatmul.mubr.bf16.gmra.mrb[0].mxu0 %v111
  %v697 = vpop.f32.mrb[0].mxu0
  %v698 = vadd.f32 %v46, %v697
  %v699 = vpop.f32.mrb[0].mxu0
  %v700 = vpop.f32.mrb[0].mxu0
  %v701 = vadd.f32 %v46, %v700
  %v702 = vpop.f32.mrb[0].mxu0
  %703 = vmatprep.mubr.bf16.mxu0 0
  %704 = vmatmul.mubr.bf16.gmra.mrb[0].mxu0 %v114
  %v705 = vpop.f32.mrb[0].mxu0
  %v706 = vadd.f32 %v46, %v705
  %v707 = vpop.f32.mrb[0].mxu0
  %v708 = vpop.f32.mrb[0].mxu0
  %v709 = vadd.f32 %v46, %v708
  %v710 = vpop.f32.mrb[0].mxu0
  %711 = vmatprep.mubr.bf16.mxu0 0
  %712 = vmatmul.mubr.bf16.gmra.mrb[0].mxu0 %v117
  %v713 = vpop.f32.mrb[0].mxu0
  %v714 = vadd.f32 %v46, %v713
  %v715 = vpop.f32.mrb[0].mxu0
  %v716 = vpop.f32.mrb[0].mxu0
  %v717 = vadd.f32 %v46, %v716
  %v718 = vpop.f32.mrb[0].mxu0
  %719 = vmatprep.mubr.bf16.mxu0 0
  %720 = vmatmul.mubr.bf16.gmra.mrb[0].mxu0 %v120
  %v721 = vpop.f32.mrb[0].mxu0
  %v722 = vadd.f32 %v46, %v721
  %v723 = vpop.f32.mrb[0].mxu0
  %v724 = vpop.f32.mrb[0].mxu0
  %v725 = vadd.f32 %v46, %v724
  %v726 = vpop.f32.mrb[0].mxu0
  %727 = vmatprep.mubr.bf16.mxu0 0
  %728 = vmatmul.mubr.bf16.gmra.mrb[0].mxu0 %v123
  %v729 = vpop.f32.mrb[0].mxu0
  %v730 = vadd.f32 %v46, %v729
  %v731 = vpop.f32.mrb[0].mxu0
  %v732 = vpop.f32.mrb[0].mxu0
  %v733 = vadd.f32 %v46, %v732
  %v734 = vpop.f32.mrb[0].mxu0
  %735 = vdwg.mxu0
  %v736 = vsel %vm222, %v674, 0.0
  %737 = vadd.xlane.f32.xlu0 %v736
  %v738 = vpop.xlane.xlu0 %737
  %v739 = vsel %vm222, %v677, 0.0
  %740 = vadd.xlane.f32.xlu0 %v739
  %v741 = vpop.xlane.xlu0 %740
  %v742 = vsel %vm222, %v682, 0.0
  %743 = vadd.xlane.f32.xlu0 %v742
  %v744 = vpop.xlane.xlu0 %743
  %v745 = vsel %vm222, %v685, 0.0
  %746 = vadd.xlane.f32.xlu0 %v745
  %v747 = vpop.xlane.xlu0 %746
  %v748 = vsel %vm222, %v690, 0.0
  %749 = vadd.xlane.f32.xlu0 %v748
  %v750 = vpop.xlane.xlu0 %749
  %v751 = vsel %vm222, %v693, 0.0
  %752 = vadd.xlane.f32.xlu0 %v751
  %v753 = vpop.xlane.xlu0 %752
  %v754 = vsel %vm222, %v698, 0.0
  %755 = vadd.xlane.f32.xlu0 %v754
  %v756 = vpop.xlane.xlu0 %755
  %v757 = vsel %vm222, %v701, 0.0
  %758 = vadd.xlane.f32.xlu0 %v757
  %v759 = vpop.xlane.xlu0 %758
  %v760 = vsel %vm222, %v706, 0.0
  %761 = vadd.xlane.f32.xlu0 %v760
  %v762 = vpop.xlane.xlu0 %761
  %v763 = vsel %vm222, %v709, 0.0
  %764 = vadd.xlane.f32.xlu0 %v763
  %v765 = vpop.xlane.xlu0 %764
  %v766 = vsel %vm222, %v714, 0.0
  %767 = vadd.xlane.f32.xlu0 %v766
  %v768 = vpop.xlane.xlu0 %767
  %v769 = vsel %vm222, %v717, 0.0
  %770 = vadd.xlane.f32.xlu0 %v769
  %v771 = vpop.xlane.xlu0 %770
  %v772 = vsel %vm222, %v722, 0.0
  %773 = vadd.xlane.f32.xlu0 %v772
  %v774 = vpop.xlane.xlu0 %773
  %v775 = vsel %vm222, %v725, 0.0
  %776 = vadd.xlane.f32.xlu0 %v775
  %v777 = vpop.xlane.xlu0 %776
  %v778 = vsel %vm222, %v730, 0.0
  %779 = vadd.xlane.f32.xlu0 %v778
  %v780 = vpop.xlane.xlu0 %779
  %v781 = vsel %vm222, %v733, 0.0
  %782 = vadd.xlane.f32.xlu0 %v781
  %v783 = vpop.xlane.xlu0 %782
  %v784 = vmul.f32 %v738, %v271
  %v785 = vmul.f32 %v741, %v271
  %v786 = vmul.f32 %v744, %v271
  %v787 = vmul.f32 %v747, %v271
  %v788 = vmul.f32 %v750, %v271
  %v789 = vmul.f32 %v753, %v271
  %v790 = vmul.f32 %v756, %v271
  %v791 = vmul.f32 %v759, %v271
  %v792 = vmul.f32 %v762, %v271
  %v793 = vmul.f32 %v765, %v271
  %v794 = vmul.f32 %v768, %v271
  %v795 = vmul.f32 %v771, %v271
  %v796 = vmul.f32 %v774, %v271
  %v797 = vmul.f32 %v777, %v271
  %v798 = vmul.f32 %v780, %v271
  %v799 = vmul.f32 %v783, %v271
  %v800 = vsub.f32 %v674, %v784
  %v801 = vsub.f32 %v677, %v785
  %v802 = vsub.f32 %v682, %v786
  %v803 = vsub.f32 %v685, %v787
  %v804 = vsub.f32 %v690, %v788
  %v805 = vsub.f32 %v693, %v789
  %v806 = vsub.f32 %v698, %v790
  %v807 = vsub.f32 %v701, %v791
  %v808 = vsub.f32 %v706, %v792
  %v809 = vsub.f32 %v709, %v793
  %v810 = vsub.f32 %v714, %v794
  %v811 = vsub.f32 %v717, %v795
  %v812 = vsub.f32 %v722, %v796
  %v813 = vsub.f32 %v725, %v797
  %v814 = vsub.f32 %v730, %v798
  %v815 = vsub.f32 %v733, %v799
  %v816 = vmul.f32 %v800, %v800
  %v817 = vmul.f32 %v801, %v801
  %v818 = vmul.f32 %v802, %v802
  %v819 = vmul.f32 %v803, %v803
  %v820 = vmul.f32 %v804, %v804
  %v821 = vmul.f32 %v805, %v805
  %v822 = vmul.f32 %v806, %v806
  %v823 = vmul.f32 %v807, %v807
  %v824 = vmul.f32 %v808, %v808
  %v825 = vmul.f32 %v809, %v809
  %v826 = vmul.f32 %v810, %v810
  %v827 = vmul.f32 %v811, %v811
  %v828 = vmul.f32 %v812, %v812
  %v829 = vmul.f32 %v813, %v813
  %v830 = vmul.f32 %v814, %v814
  %v831 = vmul.f32 %v815, %v815
  %v832 = vsel %vm222, %v816, 0.0
  %833 = vadd.xlane.f32.xlu0 %v832
  %v834 = vpop.xlane.xlu0 %833
  %v835 = vsel %vm222, %v817, 0.0
  %836 = vadd.xlane.f32.xlu0 %v835
  %v837 = vpop.xlane.xlu0 %836
  %v838 = vsel %vm222, %v818, 0.0
  %839 = vadd.xlane.f32.xlu0 %v838
  %v840 = vpop.xlane.xlu0 %839
  %v841 = vsel %vm222, %v819, 0.0
  %842 = vadd.xlane.f32.xlu0 %v841
  %v843 = vpop.xlane.xlu0 %842
  %v844 = vsel %vm222, %v820, 0.0
  %845 = vadd.xlane.f32.xlu0 %v844
  %v846 = vpop.xlane.xlu0 %845
  %v847 = vsel %vm222, %v821, 0.0
  %848 = vadd.xlane.f32.xlu0 %v847
  %v849 = vpop.xlane.xlu0 %848
  %v850 = vsel %vm222, %v822, 0.0
  %851 = vadd.xlane.f32.xlu0 %v850
  %v852 = vpop.xlane.xlu0 %851
  %v853 = vsel %vm222, %v823, 0.0
  %854 = vadd.xlane.f32.xlu0 %v853
  %v855 = vpop.xlane.xlu0 %854
  %v856 = vsel %vm222, %v824, 0.0
  %857 = vadd.xlane.f32.xlu0 %v856
  %v858 = vpop.xlane.xlu0 %857
  %v859 = vsel %vm222, %v825, 0.0
  %860 = vadd.xlane.f32.xlu0 %v859
  %v861 = vpop.xlane.xlu0 %860
  %v862 = vsel %vm222, %v826, 0.0
  %863 = vadd.xlane.f32.xlu0 %v862
  %v864 = vpop.xlane.xlu0 %863
  %v865 = vsel %vm222, %v827, 0.0
  %866 = vadd.xlane.f32.xlu0 %v865
  %v867 = vpop.xlane.xlu0 %866
  %v868 = vsel %vm222, %v828, 0.0
  %869 = vadd.xlane.f32.xlu0 %v868
  %v870 = vpop.xlane.xlu0 %869
  %v871 = vsel %vm222, %v829, 0.0
  %872 = vadd.xlane.f32.xlu0 %v871
  %v873 = vpop.xlane.xlu0 %872
  %v874 = vsel %vm222, %v830, 0.0
  %875 = vadd.xlane.f32.xlu0 %v874
  %v876 = vpop.xlane.xlu0 %875
  %v877 = vsel %vm222, %v831, 0.0
  %878 = vadd.xlane.f32.xlu0 %v877
  %v879 = vpop.xlane.xlu0 %878
  %v880 = vmul.f32 %v834, %v271
  %v881 = vmul.f32 %v837, %v271
  %v882 = vmul.f32 %v840, %v271
  %v883 = vmul.f32 %v843, %v271
  %v884 = vmul.f32 %v846, %v271
  %v885 = vmul.f32 %v849, %v271
  %v886 = vmul.f32 %v852, %v271
  %v887 = vmul.f32 %v855, %v271
  %v888 = vmul.f32 %v858, %v271
  %v889 = vmul.f32 %v861, %v271
  %v890 = vmul.f32 %v864, %v271
  %v891 = vmul.f32 %v867, %v271
  %v892 = vmul.f32 %v870, %v271
  %v893 = vmul.f32 %v873, %v271
  %v894 = vmul.f32 %v876, %v271
  %v895 = vmul.f32 %v879, %v271
  %v896 = vadd.f32 %v880, 1e-06
  %v897 = vadd.f32 %v881, 1e-06
  %v898 = vadd.f32 %v882, 1e-06
  %v899 = vadd.f32 %v883, 1e-06
  %v900 = vadd.f32 %v884, 1e-06
  %v901 = vadd.f32 %v885, 1e-06
  %v902 = vadd.f32 %v886, 1e-06
  %v903 = vadd.f32 %v887, 1e-06
  %v904 = vadd.f32 %v888, 1e-06
  %v905 = vadd.f32 %v889, 1e-06
  %v906 = vadd.f32 %v890, 1e-06
  %v907 = vadd.f32 %v891, 1e-06
  %v908 = vadd.f32 %v892, 1e-06
  %v909 = vadd.f32 %v893, 1e-06
  %v910 = vadd.f32 %v894, 1e-06
  %v911 = vadd.f32 %v895, 1e-06
  %v912 = vrsqrt.pop %v896
  %v913 = vrsqrt.pop %v897
  %v914 = vrsqrt.pop %v898
  %v915 = vrsqrt.pop %v899
  %v916 = vrsqrt.pop %v900
  %v917 = vrsqrt.pop %v901
  %v918 = vrsqrt.pop %v902
  %v919 = vrsqrt.pop %v903
  %v920 = vrsqrt.pop %v904
  %v921 = vrsqrt.pop %v905
  %v922 = vrsqrt.pop %v906
  %v923 = vrsqrt.pop %v907
  %v924 = vrsqrt.pop %v908
  %v925 = vrsqrt.pop %v909
  %v926 = vrsqrt.pop %v910
  %v927 = vrsqrt.pop %v911
  %v928 = vmul.f32 %v800, %v912
  %v929 = vmul.f32 %v801, %v913
  %v930 = vmul.f32 %v802, %v914
  %v931 = vmul.f32 %v803, %v915
  %v932 = vmul.f32 %v804, %v916
  %v933 = vmul.f32 %v805, %v917
  %v934 = vmul.f32 %v806, %v918
  %v935 = vmul.f32 %v807, %v919
  %v936 = vmul.f32 %v808, %v920
  %v937 = vmul.f32 %v809, %v921
  %v938 = vmul.f32 %v810, %v922
  %v939 = vmul.f32 %v811, %v923
  %v940 = vmul.f32 %v812, %v924
  %v941 = vmul.f32 %v813, %v925
  %v942 = vmul.f32 %v814, %v926
  %v943 = vmul.f32 %v815, %v927
  %v944 = vmul.f32 %v928, %v437
  %v945 = vmul.f32 %v929, %v437
  %v946 = vmul.f32 %v930, %v437
  %v947 = vmul.f32 %v931, %v437
  %v948 = vmul.f32 %v932, %v437
  %v949 = vmul.f32 %v933, %v437
  %v950 = vmul.f32 %v934, %v437
  %v951 = vmul.f32 %v935, %v437
  %v952 = vmul.f32 %v936, %v437
  %v953 = vmul.f32 %v937, %v437
  %v954 = vmul.f32 %v938, %v437
  %v955 = vmul.f32 %v939, %v437
  %v956 = vmul.f32 %v940, %v437
  %v957 = vmul.f32 %v941, %v437
  %v958 = vmul.f32 %v942, %v437
  %v959 = vmul.f32 %v943, %v437
  %v960 = vadd.f32 %v944, %v460
  %v961 = vadd.f32 %v945, %v460
  %v962 = vadd.f32 %v946, %v460
  %v963 = vadd.f32 %v947, %v460
  %v964 = vadd.f32 %v948, %v460
  %v965 = vadd.f32 %v949, %v460
  %v966 = vadd.f32 %v950, %v460
  %v967 = vadd.f32 %v951, %v460
  %v968 = vadd.f32 %v952, %v460
  %v969 = vadd.f32 %v953, %v460
  %v970 = vadd.f32 %v954, %v460
  %v971 = vadd.f32 %v955, %v460
  %v972 = vadd.f32 %v956, %v460
  %v973 = vadd.f32 %v957, %v460
  %v974 = vadd.f32 %v958, %v460
  %v975 = vadd.f32 %v959, %v460
  %v976 = vmul.f32 %v960, 0.5
  %v977 = vmul.f32 %v961, 0.5
  %v978 = vmul.f32 %v962, 0.5
  %v979 = vmul.f32 %v963, 0.5
  %v980 = vmul.f32 %v964, 0.5
  %v981 = vmul.f32 %v965, 0.5
  %v982 = vmul.f32 %v966, 0.5
  %v983 = vmul.f32 %v967, 0.5
  %v984 = vmul.f32 %v968, 0.5
  %v985 = vmul.f32 %v969, 0.5
  %v986 = vmul.f32 %v970, 0.5
  %v987 = vmul.f32 %v971, 0.5
  %v988 = vmul.f32 %v972, 0.5
  %v989 = vmul.f32 %v973, 0.5
  %v990 = vmul.f32 %v974, 0.5
  %v991 = vmul.f32 %v975, 0.5
  %v992 = vmul.f32 %v960, 0.044715
  %v993 = vmul.f32 %v961, 0.044715
  %v994 = vmul.f32 %v962, 0.044715
  %v995 = vmul.f32 %v963, 0.044715
  %v996 = vmul.f32 %v964, 0.044715
  %v997 = vmul.f32 %v965, 0.044715
  %v998 = vmul.f32 %v966, 0.044715
  %v999 = vmul.f32 %v967, 0.044715
  %v1000 = vmul.f32 %v968, 0.044715
  %v1001 = vmul.f32 %v969, 0.044715
  %v1002 = vmul.f32 %v970, 0.044715
  %v1003 = vmul.f32 %v971, 0.044715
  %v1004 = vmul.f32 %v972, 0.044715
  %v1005 = vmul.f32 %v973, 0.044715
  %v1006 = vmul.f32 %v974, 0.044715
  %v1007 = vmul.f32 %v975, 0.044715
  %v1008 = vmul.f32 %v992, %v960
  %v1009 = vmul.f32 %v993, %v961
  %v1010 = vmul.f32 %v994, %v962
  %v1011 = vmul.f32 %v995, %v963
  %v1012 = vmul.f32 %v996, %v964
  %v1013 = vmul.f32 %v997, %v965
  %v1014 = vmul.f32 %v998, %v966
  %v1015 = vmul.f32 %v999, %v967
  %v1016 = vmul.f32 %v1000, %v968
  %v1017 = vmul.f32 %v1001, %v969
  %v1018 = vmul.f32 %v1002, %v970
  %v1019 = vmul.f32 %v1003, %v971
  %v1020 = vmul.f32 %v1004, %v972
  %v1021 = vmul.f32 %v1005, %v973
  %v1022 = vmul.f32 %v1006, %v974
  %v1023 = vmul.f32 %v1007, %v975
  %v1024 = vmul.f32 %v1008, %v960
  %v1025 = vmul.f32 %v1009, %v961
  %v1026 = vmul.f32 %v1010, %v962
  %v1027 = vmul.f32 %v1011, %v963
  %v1028 = vmul.f32 %v1012, %v964
  %v1029 = vmul.f32 %v1013, %v965
  %v1030 = vmul.f32 %v1014, %v966
  %v1031 = vmul.f32 %v1015, %v967
  %v1032 = vmul.f32 %v1016, %v968
  %v1033 = vmul.f32 %v1017, %v969
  %v1034 = vmul.f32 %v1018, %v970
  %v1035 = vmul.f32 %v1019, %v971
  %v1036 = vmul.f32 %v1020, %v972
  %v1037 = vmul.f32 %v1021, %v973
  %v1038 = vmul.f32 %v1022, %v974
  %v1039 = vmul.f32 %v1023, %v975
  %v1040 = vadd.f32 %v960, %v1024
  %v1041 = vadd.f32 %v961, %v1025
  %v1042 = vadd.f32 %v962, %v1026
  %v1043 = vadd.f32 %v963, %v1027
  %v1044 = vadd.f32 %v964, %v1028
  %v1045 = vadd.f32 %v965, %v1029
  %v1046 = vadd.f32 %v966, %v1030
  %v1047 = vadd.f32 %v967, %v1031
  %v1048 = vadd.f32 %v968, %v1032
  %v1049 = vadd.f32 %v969, %v1033
  %v1050 = vadd.f32 %v970, %v1034
  %v1051 = vadd.f32 %v971, %v1035
  %v1052 = vadd.f32 %v972, %v1036
  %v1053 = vadd.f32 %v973, %v1037
  %v1054 = vadd.f32 %v974, %v1038
  %v1055 = vadd.f32 %v975, %v1039
  %v1056 = vmul.f32 %v1040, 0.7978846
  %v1057 = vmul.f32 %v1041, 0.7978846
  %v1058 = vmul.f32 %v1042, 0.7978846
  %v1059 = vmul.f32 %v1043, 0.7978846
  %v1060 = vmul.f32 %v1044, 0.7978846
  %v1061 = vmul.f32 %v1045, 0.7978846
  %v1062 = vmul.f32 %v1046, 0.7978846
  %v1063 = vmul.f32 %v1047, 0.7978846
  %v1064 = vmul.f32 %v1048, 0.7978846
  %v1065 = vmul.f32 %v1049, 0.7978846
  %v1066 = vmul.f32 %v1050, 0.7978846
  %v1067 = vmul.f32 %v1051, 0.7978846
  %v1068 = vmul.f32 %v1052, 0.7978846
  %v1069 = vmul.f32 %v1053, 0.7978846
  %v1070 = vmul.f32 %v1054, 0.7978846
  %v1071 = vmul.f32 %v1055, 0.7978846
  %v1072 = vtanh.pop %v1056
  %v1073 = vtanh.pop %v1057
  %v1074 = vtanh.pop %v1058
  %v1075 = vtanh.pop %v1059
  %v1076 = vtanh.pop %v1060
  %v1077 = vtanh.pop %v1061
  %v1078 = vtanh.pop %v1062
  %v1079 = vtanh.pop %v1063
  %v1080 = vtanh.pop %v1064
  %v1081 = vtanh.pop %v1065
  %v1082 = vtanh.pop %v1066
  %v1083 = vtanh.pop %v1067
  %v1084 = vtanh.pop %v1068
  %v1085 = vtanh.pop %v1069
  %v1086 = vtanh.pop %v1070
  %v1087 = vtanh.pop %v1071
  %v1088 = vadd.f32 %v1072, 1.0
  %v1089 = vadd.f32 %v1073, 1.0
  %v1090 = vadd.f32 %v1074, 1.0
  %v1091 = vadd.f32 %v1075, 1.0
  %v1092 = vadd.f32 %v1076, 1.0
  %v1093 = vadd.f32 %v1077, 1.0
  %v1094 = vadd.f32 %v1078, 1.0
  %v1095 = vadd.f32 %v1079, 1.0
  %v1096 = vadd.f32 %v1080, 1.0
  %v1097 = vadd.f32 %v1081, 1.0
  %v1098 = vadd.f32 %v1082, 1.0
  %v1099 = vadd.f32 %v1083, 1.0
  %v1100 = vadd.f32 %v1084, 1.0
  %v1101 = vadd.f32 %v1085, 1.0
  %v1102 = vadd.f32 %v1086, 1.0
  %v1103 = vadd.f32 %v1087, 1.0
  %v1104 = vmul.f32 %v976, %v1088
  %v1105 = vmul.f32 %v977, %v1089
  %v1106 = vmul.f32 %v978, %v1090
  %v1107 = vmul.f32 %v979, %v1091
  %v1108 = vmul.f32 %v980, %v1092
  %v1109 = vmul.f32 %v981, %v1093
  %v1110 = vmul.f32 %v982, %v1094
  %v1111 = vmul.f32 %v983, %v1095
  %v1112 = vmul.f32 %v984, %v1096
  %v1113 = vmul.f32 %v985, %v1097
  %v1114 = vmul.f32 %v986, %v1098
  %v1115 = vmul.f32 %v987, %v1099
  %v1116 = vmul.f32 %v988, %v1100
  %v1117 = vmul.f32 %v989, %v1101
  %v1118 = vmul.f32 %v990, %v1102
  %v1119 = vmul.f32 %v991, %v1103
  %s1120 = scalar_lea.vmem %s1, 32
  %v1121 = vld [vmem:[%s1120] sm:$0xf]
  %v1122 = vld [vmem:[%s1120 + $0x4] sm:$0xf]
  %v1123 = vld [vmem:[%s1120 + $0x8] sm:$0xf]
  %v1124 = vld [vmem:[%s1120 + $0xc] sm:$0xf]
  %v1129 = vunpack.c.l.b16 %v1121
  %v1130 = vunpack.c.l.b16 %v1122
  %v1131 = vunpack.c.l.b16 %v1123
  %v1132 = vunpack.c.l.b16 %v1124
  %v1133 = vpack.c.b16 %v1130, %v1129
  %v1134 = vpack.c.b16 %v1132, %v1131
  %1137 = vmatprep.subr.bf16.mxu0 0
  %1138 = vmatpush1.bf16.msra.mxu0 %v1133
  %1139 = vmatprep.subr.bf16.mxu0 0
  %1140 = vmatpush1.bf16.msra.mxu0 %v1134
  %1141 = vmatprep.subr.bf16.mxu0 0
  %1142 = vmatpush1.bf16.msra.mxu0 0
  %1143 = vmatprep.subr.bf16.mxu0 0
  %1144 = vmatpush1.bf16.msra.mxu0 0
  %1145 = vmatprep.subr.bf16.mxu0 0
  %1146 = vmatpush1.bf16.msra.mxu0 0
  %1147 = vmatprep.subr.bf16.mxu0 0
  %1148 = vmatpush1.bf16.msra.mxu0 0
  %1149 = vmatprep.subr.bf16.mxu0 0
  %1150 = vmatpush1.bf16.msra.mxu0 0
  %1151 = vmatprep.subr.bf16.mxu0 0
  %1152 = vmatpush1.bf16.msra.mxu0 0
  %1153 = vmatprep.subr.bf16.mxu0 0
  %1154 = vmatpush1.bf16.msra.mxu0 0
  %1155 = vmatprep.subr.bf16.mxu0 0
  %1156 = vmatpush1.bf16.msra.mxu0 0
  %1157 = vmatprep.subr.bf16.mxu0 0
  %1158 = vmatpush1.bf16.msra.mxu0 0
  %1159 = vmatprep.subr.bf16.mxu0 0
  %1160 = vmatpush1.bf16.msra.mxu0 0
  %1161 = vmatprep.subr.bf16.mxu0 0
  %1162 = vmatpush1.bf16.msra.mxu0 0
  %1163 = vmatprep.subr.bf16.mxu0 0
  %1164 = vmatpush1.bf16.msra.mxu0 0
  %1165 = vmatprep.subr.bf16.mxu0 0
  %1166 = vmatpush1.bf16.msra.mxu0 0
  %1167 = vmatprep.subr.bf16.mxu0 0
  %1168 = vmatpush1.bf16.msra.mxu0 0
  %1169 = vmatprep.mubr.bf16.mxu0 0
  %1170 = vmatmul.mubr.bf16.gmra.mrb[0].mxu0 %v102
  %v1171 = vpop.f32.mrb[0].mxu0
  %v1172 = vadd.f32 %v46, %v1171
  %v1173 = vpop.f32.mrb[0].mxu0
  %v1174 = vpop.f32.mrb[0].mxu0
  %v1175 = vadd.f32 %v46, %v1174
  %v1176 = vpop.f32.mrb[0].mxu0
  %1177 = vmatprep.mubr.bf16.mxu0 0
  %1178 = vmatmul.mubr.bf16.gmra.mrb[0].mxu0 %v105
  %v1179 = vpop.f32.mrb[0].mxu0
  %v1180 = vadd.f32 %v46, %v1179
  %v1181 = vpop.f32.mrb[0].mxu0
  %v1182 = vpop.f32.mrb[0].mxu0
  %v1183 = vadd.f32 %v46, %v1182
  %v1184 = vpop.f32.mrb[0].mxu0
  %1185 = vmatprep.mubr.bf16.mxu0 0
  %1186 = vmatmul.mubr.bf16.gmra.mrb[0].mxu0 %v108
  %v1187 = vpop.f32.mrb[0].mxu0
  %v1188 = vadd.f32 %v46, %v1187
  %v1189 = vpop.f32.mrb[0].mxu0
  %v1190 = vpop.f32.mrb[0].mxu0
  %v1191 = vadd.f32 %v46, %v1190
  %v1192 = vpop.f32.mrb[0].mxu0
  %1193 = vmatprep.mubr.bf16.mxu0 0
  %1194 = vmatmul.mubr.bf16.gmra.mrb[0].mxu0 %v111
  %v1195 = vpop.f32.mrb[0].mxu0
  %v1196 = vadd.f32 %v46, %v1195
  %v1197 = vpop.f32.mrb[0].mxu0
  %v1198 = vpop.f32.mrb[0].mxu0
  %v1199 = vadd.f32 %v46, %v1198
  %v1200 = vpop.f32.mrb[0].mxu0
  %1201 = vmatprep.mubr.bf16.mxu0 0
  %1202 = vmatmul.mubr.bf16.gmra.mrb[0].mxu0 %v114
  %v1203 = vpop.f32.mrb[0].mxu0
  %v1204 = vadd.f32 %v46, %v1203
  %v1205 = vpop.f32.mrb[0].mxu0
  %v1206 = vpop.f32.mrb[0].mxu0
  %v1207 = vadd.f32 %v46, %v1206
  %v1208 = vpop.f32.mrb[0].mxu0
  %1209 = vmatprep.mubr.bf16.mxu0 0
  %1210 = vmatmul.mubr.bf16.gmra.mrb[0].mxu0 %v117
  %v1211 = vpop.f32.mrb[0].mxu0
  %v1212 = vadd.f32 %v46, %v1211
  %v1213 = vpop.f32.mrb[0].mxu0
  %v1214 = vpop.f32.mrb[0].mxu0
  %v1215 = vadd.f32 %v46, %v1214
  %v1216 = vpop.f32.mrb[0].mxu0
  %1217 = vmatprep.mubr.bf16.mxu0 0
  %1218 = vmatmul.mubr.bf16.gmra.mrb[0].mxu0 %v120
  %v1219 = vpop.f32.mrb[0].mxu0
  %v1220 = vadd.f32 %v46, %v1219
  %v1221 = vpop.f32.mrb[0].mxu0
  %v1222 = vpop.f32.mrb[0].mxu0
  %v1223 = vadd.f32 %v46, %v1222
  %v1224 = vpop.f32.mrb[0].mxu0
  %1225 = vmatprep.mubr.bf16.mxu0 0
  %1226 = vmatmul.mubr.bf16.gmra.mrb[0].mxu0 %v123
  %v1227 = vpop.f32.mrb[0].mxu0
  %v1228 = vadd.f32 %v46, %v1227
  %v1229 = vpop.f32.mrb[0].mxu0
  %v1230 = vpop.f32.mrb[0].mxu0
  %v1231 = vadd.f32 %v46, %v1230
  %v1232 = vpop.f32.mrb[0].mxu0
  %1233 = vdwg.mxu0
  %v1234 = vsel %vm222, %v1172, 0.0
  %1235 = vadd.xlane.f32.xlu0 %v1234
  %v1236 = vpop.xlane.xlu0 %1235
  %v1237 = vsel %vm222, %v1175, 0.0
  %1238 = vadd.xlane.f32.xlu0 %v1237
  %v1239 = vpop.xlane.xlu0 %1238
  %v1240 = vsel %vm222, %v1180, 0.0
  %1241 = vadd.xlane.f32.xlu0 %v1240
  %v1242 = vpop.xlane.xlu0 %1241
  %v1243 = vsel %vm222, %v1183, 0.0
  %1244 = vadd.xlane.f32.xlu0 %v1243
  %v1245 = vpop.xlane.xlu0 %1244
  %v1246 = vsel %vm222, %v1188, 0.0
  %1247 = vadd.xlane.f32.xlu0 %v1246
  %v1248 = vpop.xlane.xlu0 %1247
  %v1249 = vsel %vm222, %v1191, 0.0
  %1250 = vadd.xlane.f32.xlu0 %v1249
  %v1251 = vpop.xlane.xlu0 %1250
  %v1252 = vsel %vm222, %v1196, 0.0
  %1253 = vadd.xlane.f32.xlu0 %v1252
  %v1254 = vpop.xlane.xlu0 %1253
  %v1255 = vsel %vm222, %v1199, 0.0
  %1256 = vadd.xlane.f32.xlu0 %v1255
  %v1257 = vpop.xlane.xlu0 %1256
  %v1258 = vsel %vm222, %v1204, 0.0
  %1259 = vadd.xlane.f32.xlu0 %v1258
  %v1260 = vpop.xlane.xlu0 %1259
  %v1261 = vsel %vm222, %v1207, 0.0
  %1262 = vadd.xlane.f32.xlu0 %v1261
  %v1263 = vpop.xlane.xlu0 %1262
  %v1264 = vsel %vm222, %v1212, 0.0
  %1265 = vadd.xlane.f32.xlu0 %v1264
  %v1266 = vpop.xlane.xlu0 %1265
  %v1267 = vsel %vm222, %v1215, 0.0
  %1268 = vadd.xlane.f32.xlu0 %v1267
  %v1269 = vpop.xlane.xlu0 %1268
  %v1270 = vsel %vm222, %v1220, 0.0
  %1271 = vadd.xlane.f32.xlu0 %v1270
  %v1272 = vpop.xlane.xlu0 %1271
  %v1273 = vsel %vm222, %v1223, 0.0
  %1274 = vadd.xlane.f32.xlu0 %v1273
  %v1275 = vpop.xlane.xlu0 %1274
  %v1276 = vsel %vm222, %v1228, 0.0
  %1277 = vadd.xlane.f32.xlu0 %v1276
  %v1278 = vpop.xlane.xlu0 %1277
  %v1279 = vsel %vm222, %v1231, 0.0
  %1280 = vadd.xlane.f32.xlu0 %v1279
  %v1281 = vpop.xlane.xlu0 %1280
  %v1282 = vmul.f32 %v1236, %v271
  %v1283 = vmul.f32 %v1239, %v271
  %v1284 = vmul.f32 %v1242, %v271
  %v1285 = vmul.f32 %v1245, %v271
  %v1286 = vmul.f32 %v1248, %v271
  %v1287 = vmul.f32 %v1251, %v271
  %v1288 = vmul.f32 %v1254, %v271
  %v1289 = vmul.f32 %v1257, %v271
  %v1290 = vmul.f32 %v1260, %v271
  %v1291 = vmul.f32 %v1263, %v271
  %v1292 = vmul.f32 %v1266, %v271
  %v1293 = vmul.f32 %v1269, %v271
  %v1294 = vmul.f32 %v1272, %v271
  %v1295 = vmul.f32 %v1275, %v271
  %v1296 = vmul.f32 %v1278, %v271
  %v1297 = vmul.f32 %v1281, %v271
  %v1298 = vsub.f32 %v1172, %v1282
  %v1299 = vsub.f32 %v1175, %v1283
  %v1300 = vsub.f32 %v1180, %v1284
  %v1301 = vsub.f32 %v1183, %v1285
  %v1302 = vsub.f32 %v1188, %v1286
  %v1303 = vsub.f32 %v1191, %v1287
  %v1304 = vsub.f32 %v1196, %v1288
  %v1305 = vsub.f32 %v1199, %v1289
  %v1306 = vsub.f32 %v1204, %v1290
  %v1307 = vsub.f32 %v1207, %v1291
  %v1308 = vsub.f32 %v1212, %v1292
  %v1309 = vsub.f32 %v1215, %v1293
  %v1310 = vsub.f32 %v1220, %v1294
  %v1311 = vsub.f32 %v1223, %v1295
  %v1312 = vsub.f32 %v1228, %v1296
  %v1313 = vsub.f32 %v1231, %v1297
  %v1314 = vmul.f32 %v1298, %v1298
  %v1315 = vmul.f32 %v1299, %v1299
  %v1316 = vmul.f32 %v1300, %v1300
  %v1317 = vmul.f32 %v1301, %v1301
  %v1318 = vmul.f32 %v1302, %v1302
  %v1319 = vmul.f32 %v1303, %v1303
  %v1320 = vmul.f32 %v1304, %v1304
  %v1321 = vmul.f32 %v1305, %v1305
  %v1322 = vmul.f32 %v1306, %v1306
  %v1323 = vmul.f32 %v1307, %v1307
  %v1324 = vmul.f32 %v1308, %v1308
  %v1325 = vmul.f32 %v1309, %v1309
  %v1326 = vmul.f32 %v1310, %v1310
  %v1327 = vmul.f32 %v1311, %v1311
  %v1328 = vmul.f32 %v1312, %v1312
  %v1329 = vmul.f32 %v1313, %v1313
  %v1330 = vsel %vm222, %v1314, 0.0
  %1331 = vadd.xlane.f32.xlu0 %v1330
  %v1332 = vpop.xlane.xlu0 %1331
  %v1333 = vsel %vm222, %v1315, 0.0
  %1334 = vadd.xlane.f32.xlu0 %v1333
  %v1335 = vpop.xlane.xlu0 %1334
  %v1336 = vsel %vm222, %v1316, 0.0
  %1337 = vadd.xlane.f32.xlu0 %v1336
  %v1338 = vpop.xlane.xlu0 %1337
  %v1339 = vsel %vm222, %v1317, 0.0
  %1340 = vadd.xlane.f32.xlu0 %v1339
  %v1341 = vpop.xlane.xlu0 %1340
  %v1342 = vsel %vm222, %v1318, 0.0
  %1343 = vadd.xlane.f32.xlu0 %v1342
  %v1344 = vpop.xlane.xlu0 %1343
  %v1345 = vsel %vm222, %v1319, 0.0
  %1346 = vadd.xlane.f32.xlu0 %v1345
  %v1347 = vpop.xlane.xlu0 %1346
  %v1348 = vsel %vm222, %v1320, 0.0
  %1349 = vadd.xlane.f32.xlu0 %v1348
  %v1350 = vpop.xlane.xlu0 %1349
  %v1351 = vsel %vm222, %v1321, 0.0
  %1352 = vadd.xlane.f32.xlu0 %v1351
  %v1353 = vpop.xlane.xlu0 %1352
  %v1354 = vsel %vm222, %v1322, 0.0
  %1355 = vadd.xlane.f32.xlu0 %v1354
  %v1356 = vpop.xlane.xlu0 %1355
  %v1357 = vsel %vm222, %v1323, 0.0
  %1358 = vadd.xlane.f32.xlu0 %v1357
  %v1359 = vpop.xlane.xlu0 %1358
  %v1360 = vsel %vm222, %v1324, 0.0
  %1361 = vadd.xlane.f32.xlu0 %v1360
  %v1362 = vpop.xlane.xlu0 %1361
  %v1363 = vsel %vm222, %v1325, 0.0
  %1364 = vadd.xlane.f32.xlu0 %v1363
  %v1365 = vpop.xlane.xlu0 %1364
  %v1366 = vsel %vm222, %v1326, 0.0
  %1367 = vadd.xlane.f32.xlu0 %v1366
  %v1368 = vpop.xlane.xlu0 %1367
  %v1369 = vsel %vm222, %v1327, 0.0
  %1370 = vadd.xlane.f32.xlu0 %v1369
  %v1371 = vpop.xlane.xlu0 %1370
  %v1372 = vsel %vm222, %v1328, 0.0
  %1373 = vadd.xlane.f32.xlu0 %v1372
  %v1374 = vpop.xlane.xlu0 %1373
  %v1375 = vsel %vm222, %v1329, 0.0
  %1376 = vadd.xlane.f32.xlu0 %v1375
  %v1377 = vpop.xlane.xlu0 %1376
  %v1378 = vmul.f32 %v1332, %v271
  %v1379 = vmul.f32 %v1335, %v271
  %v1380 = vmul.f32 %v1338, %v271
  %v1381 = vmul.f32 %v1341, %v271
  %v1382 = vmul.f32 %v1344, %v271
  %v1383 = vmul.f32 %v1347, %v271
  %v1384 = vmul.f32 %v1350, %v271
  %v1385 = vmul.f32 %v1353, %v271
  %v1386 = vmul.f32 %v1356, %v271
  %v1387 = vmul.f32 %v1359, %v271
  %v1388 = vmul.f32 %v1362, %v271
  %v1389 = vmul.f32 %v1365, %v271
  %v1390 = vmul.f32 %v1368, %v271
  %v1391 = vmul.f32 %v1371, %v271
  %v1392 = vmul.f32 %v1374, %v271
  %v1393 = vmul.f32 %v1377, %v271
  %v1394 = vadd.f32 %v1378, 1e-06
  %v1395 = vadd.f32 %v1379, 1e-06
  %v1396 = vadd.f32 %v1380, 1e-06
  %v1397 = vadd.f32 %v1381, 1e-06
  %v1398 = vadd.f32 %v1382, 1e-06
  %v1399 = vadd.f32 %v1383, 1e-06
  %v1400 = vadd.f32 %v1384, 1e-06
  %v1401 = vadd.f32 %v1385, 1e-06
  %v1402 = vadd.f32 %v1386, 1e-06
  %v1403 = vadd.f32 %v1387, 1e-06
  %v1404 = vadd.f32 %v1388, 1e-06
  %v1405 = vadd.f32 %v1389, 1e-06
  %v1406 = vadd.f32 %v1390, 1e-06
  %v1407 = vadd.f32 %v1391, 1e-06
  %v1408 = vadd.f32 %v1392, 1e-06
  %v1409 = vadd.f32 %v1393, 1e-06
  %v1410 = vrsqrt.pop %v1394
  %v1411 = vrsqrt.pop %v1395
  %v1412 = vrsqrt.pop %v1396
  %v1413 = vrsqrt.pop %v1397
  %v1414 = vrsqrt.pop %v1398
  %v1415 = vrsqrt.pop %v1399
  %v1416 = vrsqrt.pop %v1400
  %v1417 = vrsqrt.pop %v1401
  %v1418 = vrsqrt.pop %v1402
  %v1419 = vrsqrt.pop %v1403
  %v1420 = vrsqrt.pop %v1404
  %v1421 = vrsqrt.pop %v1405
  %v1422 = vrsqrt.pop %v1406
  %v1423 = vrsqrt.pop %v1407
  %v1424 = vrsqrt.pop %v1408
  %v1425 = vrsqrt.pop %v1409
  %v1426 = vmul.f32 %v1298, %v1410
  %v1427 = vmul.f32 %v1299, %v1411
  %v1428 = vmul.f32 %v1300, %v1412
  %v1429 = vmul.f32 %v1301, %v1413
  %v1430 = vmul.f32 %v1302, %v1414
  %v1431 = vmul.f32 %v1303, %v1415
  %v1432 = vmul.f32 %v1304, %v1416
  %v1433 = vmul.f32 %v1305, %v1417
  %v1434 = vmul.f32 %v1306, %v1418
  %v1435 = vmul.f32 %v1307, %v1419
  %v1436 = vmul.f32 %v1308, %v1420
  %v1437 = vmul.f32 %v1309, %v1421
  %v1438 = vmul.f32 %v1310, %v1422
  %v1439 = vmul.f32 %v1311, %v1423
  %v1440 = vmul.f32 %v1312, %v1424
  %v1441 = vmul.f32 %v1313, %v1425
  %v1442 = vmul.f32 %v1426, %v437
  %v1443 = vmul.f32 %v1427, %v437
  %v1444 = vmul.f32 %v1428, %v437
  %v1445 = vmul.f32 %v1429, %v437
  %v1446 = vmul.f32 %v1430, %v437
  %v1447 = vmul.f32 %v1431, %v437
  %v1448 = vmul.f32 %v1432, %v437
  %v1449 = vmul.f32 %v1433, %v437
  %v1450 = vmul.f32 %v1434, %v437
  %v1451 = vmul.f32 %v1435, %v437
  %v1452 = vmul.f32 %v1436, %v437
  %v1453 = vmul.f32 %v1437, %v437
  %v1454 = vmul.f32 %v1438, %v437
  %v1455 = vmul.f32 %v1439, %v437
  %v1456 = vmul.f32 %v1440, %v437
  %v1457 = vmul.f32 %v1441, %v437
  %v1458 = vadd.f32 %v1442, %v460
  %v1459 = vadd.f32 %v1443, %v460
  %v1460 = vadd.f32 %v1444, %v460
  %v1461 = vadd.f32 %v1445, %v460
  %v1462 = vadd.f32 %v1446, %v460
  %v1463 = vadd.f32 %v1447, %v460
  %v1464 = vadd.f32 %v1448, %v460
  %v1465 = vadd.f32 %v1449, %v460
  %v1466 = vadd.f32 %v1450, %v460
  %v1467 = vadd.f32 %v1451, %v460
  %v1468 = vadd.f32 %v1452, %v460
  %v1469 = vadd.f32 %v1453, %v460
  %v1470 = vadd.f32 %v1454, %v460
  %v1471 = vadd.f32 %v1455, %v460
  %v1472 = vadd.f32 %v1456, %v460
  %v1473 = vadd.f32 %v1457, %v460
  %v1474 = vmul.f32 %v1458, 0.5
  %v1475 = vmul.f32 %v1459, 0.5
  %v1476 = vmul.f32 %v1460, 0.5
  %v1477 = vmul.f32 %v1461, 0.5
  %v1478 = vmul.f32 %v1462, 0.5
  %v1479 = vmul.f32 %v1463, 0.5
  %v1480 = vmul.f32 %v1464, 0.5
  %v1481 = vmul.f32 %v1465, 0.5
  %v1482 = vmul.f32 %v1466, 0.5
  %v1483 = vmul.f32 %v1467, 0.5
  %v1484 = vmul.f32 %v1468, 0.5
  %v1485 = vmul.f32 %v1469, 0.5
  %v1486 = vmul.f32 %v1470, 0.5
  %v1487 = vmul.f32 %v1471, 0.5
  %v1488 = vmul.f32 %v1472, 0.5
  %v1489 = vmul.f32 %v1473, 0.5
  %v1490 = vmul.f32 %v1458, 0.044715
  %v1491 = vmul.f32 %v1459, 0.044715
  %v1492 = vmul.f32 %v1460, 0.044715
  %v1493 = vmul.f32 %v1461, 0.044715
  %v1494 = vmul.f32 %v1462, 0.044715
  %v1495 = vmul.f32 %v1463, 0.044715
  %v1496 = vmul.f32 %v1464, 0.044715
  %v1497 = vmul.f32 %v1465, 0.044715
  %v1498 = vmul.f32 %v1466, 0.044715
  %v1499 = vmul.f32 %v1467, 0.044715
  %v1500 = vmul.f32 %v1468, 0.044715
  %v1501 = vmul.f32 %v1469, 0.044715
  %v1502 = vmul.f32 %v1470, 0.044715
  %v1503 = vmul.f32 %v1471, 0.044715
  %v1504 = vmul.f32 %v1472, 0.044715
  %v1505 = vmul.f32 %v1473, 0.044715
  %v1506 = vmul.f32 %v1490, %v1458
  %v1507 = vmul.f32 %v1491, %v1459
  %v1508 = vmul.f32 %v1492, %v1460
  %v1509 = vmul.f32 %v1493, %v1461
  %v1510 = vmul.f32 %v1494, %v1462
  %v1511 = vmul.f32 %v1495, %v1463
  %v1512 = vmul.f32 %v1496, %v1464
  %v1513 = vmul.f32 %v1497, %v1465
  %v1514 = vmul.f32 %v1498, %v1466
  %v1515 = vmul.f32 %v1499, %v1467
  %v1516 = vmul.f32 %v1500, %v1468
  %v1517 = vmul.f32 %v1501, %v1469
  %v1518 = vmul.f32 %v1502, %v1470
  %v1519 = vmul.f32 %v1503, %v1471
  %v1520 = vmul.f32 %v1504, %v1472
  %v1521 = vmul.f32 %v1505, %v1473
  %v1522 = vmul.f32 %v1506, %v1458
  %v1523 = vmul.f32 %v1507, %v1459
  %v1524 = vmul.f32 %v1508, %v1460
  %v1525 = vmul.f32 %v1509, %v1461
  %v1526 = vmul.f32 %v1510, %v1462
  %v1527 = vmul.f32 %v1511, %v1463
  %v1528 = vmul.f32 %v1512, %v1464
  %v1529 = vmul.f32 %v1513, %v1465
  %v1530 = vmul.f32 %v1514, %v1466
  %v1531 = vmul.f32 %v1515, %v1467
  %v1532 = vmul.f32 %v1516, %v1468
  %v1533 = vmul.f32 %v1517, %v1469
  %v1534 = vmul.f32 %v1518, %v1470
  %v1535 = vmul.f32 %v1519, %v1471
  %v1536 = vmul.f32 %v1520, %v1472
  %v1537 = vmul.f32 %v1521, %v1473
  %v1538 = vadd.f32 %v1458, %v1522
  %v1539 = vadd.f32 %v1459, %v1523
  %v1540 = vadd.f32 %v1460, %v1524
  %v1541 = vadd.f32 %v1461, %v1525
  %v1542 = vadd.f32 %v1462, %v1526
  %v1543 = vadd.f32 %v1463, %v1527
  %v1544 = vadd.f32 %v1464, %v1528
  %v1545 = vadd.f32 %v1465, %v1529
  %v1546 = vadd.f32 %v1466, %v1530
  %v1547 = vadd.f32 %v1467, %v1531
  %v1548 = vadd.f32 %v1468, %v1532
  %v1549 = vadd.f32 %v1469, %v1533
  %v1550 = vadd.f32 %v1470, %v1534
  %v1551 = vadd.f32 %v1471, %v1535
  %v1552 = vadd.f32 %v1472, %v1536
  %v1553 = vadd.f32 %v1473, %v1537
  %v1554 = vmul.f32 %v1538, 0.7978846
  %v1555 = vmul.f32 %v1539, 0.7978846
  %v1556 = vmul.f32 %v1540, 0.7978846
  %v1557 = vmul.f32 %v1541, 0.7978846
  %v1558 = vmul.f32 %v1542, 0.7978846
  %v1559 = vmul.f32 %v1543, 0.7978846
  %v1560 = vmul.f32 %v1544, 0.7978846
  %v1561 = vmul.f32 %v1545, 0.7978846
  %v1562 = vmul.f32 %v1546, 0.7978846
  %v1563 = vmul.f32 %v1547, 0.7978846
  %v1564 = vmul.f32 %v1548, 0.7978846
  %v1565 = vmul.f32 %v1549, 0.7978846
  %v1566 = vmul.f32 %v1550, 0.7978846
  %v1567 = vmul.f32 %v1551, 0.7978846
  %v1568 = vmul.f32 %v1552, 0.7978846
  %v1569 = vmul.f32 %v1553, 0.7978846
  %v1570 = vtanh.pop %v1554
  %v1571 = vtanh.pop %v1555
  %v1572 = vtanh.pop %v1556
  %v1573 = vtanh.pop %v1557
  %v1574 = vtanh.pop %v1558
  %v1575 = vtanh.pop %v1559
  %v1576 = vtanh.pop %v1560
  %v1577 = vtanh.pop %v1561
  %v1578 = vtanh.pop %v1562
  %v1579 = vtanh.pop %v1563
  %v1580 = vtanh.pop %v1564
  %v1581 = vtanh.pop %v1565
  %v1582 = vtanh.pop %v1566
  %v1583 = vtanh.pop %v1567
  %v1584 = vtanh.pop %v1568
  %v1585 = vtanh.pop %v1569
  %v1586 = vadd.f32 %v1570, 1.0
  %v1587 = vadd.f32 %v1571, 1.0
  %v1588 = vadd.f32 %v1572, 1.0
  %v1589 = vadd.f32 %v1573, 1.0
  %v1590 = vadd.f32 %v1574, 1.0
  %v1591 = vadd.f32 %v1575, 1.0
  %v1592 = vadd.f32 %v1576, 1.0
  %v1593 = vadd.f32 %v1577, 1.0
  %v1594 = vadd.f32 %v1578, 1.0
  %v1595 = vadd.f32 %v1579, 1.0
  %v1596 = vadd.f32 %v1580, 1.0
  %v1597 = vadd.f32 %v1581, 1.0
  %v1598 = vadd.f32 %v1582, 1.0
  %v1599 = vadd.f32 %v1583, 1.0
  %v1600 = vadd.f32 %v1584, 1.0
  %v1601 = vadd.f32 %v1585, 1.0
  %v1602 = vmul.f32 %v1474, %v1586
  %v1603 = vmul.f32 %v1475, %v1587
  %v1604 = vmul.f32 %v1476, %v1588
  %v1605 = vmul.f32 %v1477, %v1589
  %v1606 = vmul.f32 %v1478, %v1590
  %v1607 = vmul.f32 %v1479, %v1591
  %v1608 = vmul.f32 %v1480, %v1592
  %v1609 = vmul.f32 %v1481, %v1593
  %v1610 = vmul.f32 %v1482, %v1594
  %v1611 = vmul.f32 %v1483, %v1595
  %v1612 = vmul.f32 %v1484, %v1596
  %v1613 = vmul.f32 %v1485, %v1597
  %v1614 = vmul.f32 %v1486, %v1598
  %v1615 = vmul.f32 %v1487, %v1599
  %v1616 = vmul.f32 %v1488, %v1600
  %v1617 = vmul.f32 %v1489, %v1601
  %s1618 = scalar_lea.vmem %s1, 48
  %v1619 = vld [vmem:[%s1618] sm:$0xf]
  %v1620 = vld [vmem:[%s1618 + $0x4] sm:$0xf]
  %v1621 = vld [vmem:[%s1618 + $0x8] sm:$0xf]
  %v1622 = vld [vmem:[%s1618 + $0xc] sm:$0xf]
  %v1627 = vunpack.c.l.b16 %v1619
  %v1628 = vunpack.c.l.b16 %v1620
  %v1629 = vunpack.c.l.b16 %v1621
  %v1630 = vunpack.c.l.b16 %v1622
  %v1631 = vpack.c.b16 %v1628, %v1627
  %v1632 = vpack.c.b16 %v1630, %v1629
  %1635 = vmatprep.subr.bf16.mxu0 0
  %1636 = vmatpush1.bf16.msra.mxu0 %v1631
  %1637 = vmatprep.subr.bf16.mxu0 0
  %1638 = vmatpush1.bf16.msra.mxu0 %v1632
  %1639 = vmatprep.subr.bf16.mxu0 0
  %1640 = vmatpush1.bf16.msra.mxu0 0
  %1641 = vmatprep.subr.bf16.mxu0 0
  %1642 = vmatpush1.bf16.msra.mxu0 0
  %1643 = vmatprep.subr.bf16.mxu0 0
  %1644 = vmatpush1.bf16.msra.mxu0 0
  %1645 = vmatprep.subr.bf16.mxu0 0
  %1646 = vmatpush1.bf16.msra.mxu0 0
  %1647 = vmatprep.subr.bf16.mxu0 0
  %1648 = vmatpush1.bf16.msra.mxu0 0
  %1649 = vmatprep.subr.bf16.mxu0 0
  %1650 = vmatpush1.bf16.msra.mxu0 0
  %1651 = vmatprep.subr.bf16.mxu0 0
  %1652 = vmatpush1.bf16.msra.mxu0 0
  %1653 = vmatprep.subr.bf16.mxu0 0
  %1654 = vmatpush1.bf16.msra.mxu0 0
  %1655 = vmatprep.subr.bf16.mxu0 0
  %1656 = vmatpush1.bf16.msra.mxu0 0
  %1657 = vmatprep.subr.bf16.mxu0 0
  %1658 = vmatpush1.bf16.msra.mxu0 0
  %1659 = vmatprep.subr.bf16.mxu0 0
  %1660 = vmatpush1.bf16.msra.mxu0 0
  %1661 = vmatprep.subr.bf16.mxu0 0
  %1662 = vmatpush1.bf16.msra.mxu0 0
  %1663 = vmatprep.subr.bf16.mxu0 0
  %1664 = vmatpush1.bf16.msra.mxu0 0
  %1665 = vmatprep.subr.bf16.mxu0 0
  %1666 = vmatpush1.bf16.msra.mxu0 0
  %1667 = vmatprep.mubr.bf16.mxu0 0
  %1668 = vmatmul.mubr.bf16.gmra.mrb[0].mxu0 %v102
  %v1669 = vpop.f32.mrb[0].mxu0
  %v1670 = vadd.f32 %v46, %v1669
  %v1671 = vpop.f32.mrb[0].mxu0
  %v1672 = vpop.f32.mrb[0].mxu0
  %v1673 = vadd.f32 %v46, %v1672
  %v1674 = vpop.f32.mrb[0].mxu0
  %1675 = vmatprep.mubr.bf16.mxu0 0
  %1676 = vmatmul.mubr.bf16.gmra.mrb[0].mxu0 %v105
  %v1677 = vpop.f32.mrb[0].mxu0
  %v1678 = vadd.f32 %v46, %v1677
  %v1679 = vpop.f32.mrb[0].mxu0
  %v1680 = vpop.f32.mrb[0].mxu0
  %v1681 = vadd.f32 %v46, %v1680
  %v1682 = vpop.f32.mrb[0].mxu0
  %1683 = vmatprep.mubr.bf16.mxu0 0
  %1684 = vmatmul.mubr.bf16.gmra.mrb[0].mxu0 %v108
  %v1685 = vpop.f32.mrb[0].mxu0
  %v1686 = vadd.f32 %v46, %v1685
  %v1687 = vpop.f32.mrb[0].mxu0
  %v1688 = vpop.f32.mrb[0].mxu0
  %v1689 = vadd.f32 %v46, %v1688
  %v1690 = vpop.f32.mrb[0].mxu0
  %1691 = vmatprep.mubr.bf16.mxu0 0
  %1692 = vmatmul.mubr.bf16.gmra.mrb[0].mxu0 %v111
  %v1693 = vpop.f32.mrb[0].mxu0
  %v1694 = vadd.f32 %v46, %v1693
  %v1695 = vpop.f32.mrb[0].mxu0
  %v1696 = vpop.f32.mrb[0].mxu0
  %v1697 = vadd.f32 %v46, %v1696
  %v1698 = vpop.f32.mrb[0].mxu0
  %1699 = vmatprep.mubr.bf16.mxu0 0
  %1700 = vmatmul.mubr.bf16.gmra.mrb[0].mxu0 %v114
  %v1701 = vpop.f32.mrb[0].mxu0
  %v1702 = vadd.f32 %v46, %v1701
  %v1703 = vpop.f32.mrb[0].mxu0
  %v1704 = vpop.f32.mrb[0].mxu0
  %v1705 = vadd.f32 %v46, %v1704
  %v1706 = vpop.f32.mrb[0].mxu0
  %1707 = vmatprep.mubr.bf16.mxu0 0
  %1708 = vmatmul.mubr.bf16.gmra.mrb[0].mxu0 %v117
  %v1709 = vpop.f32.mrb[0].mxu0
  %v1710 = vadd.f32 %v46, %v1709
  %v1711 = vpop.f32.mrb[0].mxu0
  %v1712 = vpop.f32.mrb[0].mxu0
  %v1713 = vadd.f32 %v46, %v1712
  %v1714 = vpop.f32.mrb[0].mxu0
  %1715 = vmatprep.mubr.bf16.mxu0 0
  %1716 = vmatmul.mubr.bf16.gmra.mrb[0].mxu0 %v120
  %v1717 = vpop.f32.mrb[0].mxu0
  %v1718 = vadd.f32 %v46, %v1717
  %v1719 = vpop.f32.mrb[0].mxu0
  %v1720 = vpop.f32.mrb[0].mxu0
  %v1721 = vadd.f32 %v46, %v1720
  %v1722 = vpop.f32.mrb[0].mxu0
  %1723 = vmatprep.mubr.bf16.mxu0 0
  %1724 = vmatmul.mubr.bf16.gmra.mrb[0].mxu0 %v123
  %v1725 = vpop.f32.mrb[0].mxu0
  %v1726 = vadd.f32 %v46, %v1725
  %v1727 = vpop.f32.mrb[0].mxu0
  %v1728 = vpop.f32.mrb[0].mxu0
  %v1729 = vadd.f32 %v46, %v1728
  %v1730 = vpop.f32.mrb[0].mxu0
  %1731 = vdwg.mxu0
  %v1732 = vsel %vm222, %v1670, 0.0
  %1733 = vadd.xlane.f32.xlu0 %v1732
  %v1734 = vpop.xlane.xlu0 %1733
  %v1735 = vsel %vm222, %v1673, 0.0
  %1736 = vadd.xlane.f32.xlu0 %v1735
  %v1737 = vpop.xlane.xlu0 %1736
  %v1738 = vsel %vm222, %v1678, 0.0
  %1739 = vadd.xlane.f32.xlu0 %v1738
  %v1740 = vpop.xlane.xlu0 %1739
  %v1741 = vsel %vm222, %v1681, 0.0
  %1742 = vadd.xlane.f32.xlu0 %v1741
  %v1743 = vpop.xlane.xlu0 %1742
  %v1744 = vsel %vm222, %v1686, 0.0
  %1745 = vadd.xlane.f32.xlu0 %v1744
  %v1746 = vpop.xlane.xlu0 %1745
  %v1747 = vsel %vm222, %v1689, 0.0
  %1748 = vadd.xlane.f32.xlu0 %v1747
  %v1749 = vpop.xlane.xlu0 %1748
  %v1750 = vsel %vm222, %v1694, 0.0
  %1751 = vadd.xlane.f32.xlu0 %v1750
  %v1752 = vpop.xlane.xlu0 %1751
  %v1753 = vsel %vm222, %v1697, 0.0
  %1754 = vadd.xlane.f32.xlu0 %v1753
  %v1755 = vpop.xlane.xlu0 %1754
  %v1756 = vsel %vm222, %v1702, 0.0
  %1757 = vadd.xlane.f32.xlu0 %v1756
  %v1758 = vpop.xlane.xlu0 %1757
  %v1759 = vsel %vm222, %v1705, 0.0
  %1760 = vadd.xlane.f32.xlu0 %v1759
  %v1761 = vpop.xlane.xlu0 %1760
  %v1762 = vsel %vm222, %v1710, 0.0
  %1763 = vadd.xlane.f32.xlu0 %v1762
  %v1764 = vpop.xlane.xlu0 %1763
  %v1765 = vsel %vm222, %v1713, 0.0
  %1766 = vadd.xlane.f32.xlu0 %v1765
  %v1767 = vpop.xlane.xlu0 %1766
  %v1768 = vsel %vm222, %v1718, 0.0
  %1769 = vadd.xlane.f32.xlu0 %v1768
  %v1770 = vpop.xlane.xlu0 %1769
  %v1771 = vsel %vm222, %v1721, 0.0
  %1772 = vadd.xlane.f32.xlu0 %v1771
  %v1773 = vpop.xlane.xlu0 %1772
  %v1774 = vsel %vm222, %v1726, 0.0
  %1775 = vadd.xlane.f32.xlu0 %v1774
  %v1776 = vpop.xlane.xlu0 %1775
  %v1777 = vsel %vm222, %v1729, 0.0
  %1778 = vadd.xlane.f32.xlu0 %v1777
  %v1779 = vpop.xlane.xlu0 %1778
  %v1780 = vmul.f32 %v1734, %v271
  %v1781 = vmul.f32 %v1737, %v271
  %v1782 = vmul.f32 %v1740, %v271
  %v1783 = vmul.f32 %v1743, %v271
  %v1784 = vmul.f32 %v1746, %v271
  %v1785 = vmul.f32 %v1749, %v271
  %v1786 = vmul.f32 %v1752, %v271
  %v1787 = vmul.f32 %v1755, %v271
  %v1788 = vmul.f32 %v1758, %v271
  %v1789 = vmul.f32 %v1761, %v271
  %v1790 = vmul.f32 %v1764, %v271
  %v1791 = vmul.f32 %v1767, %v271
  %v1792 = vmul.f32 %v1770, %v271
  %v1793 = vmul.f32 %v1773, %v271
  %v1794 = vmul.f32 %v1776, %v271
  %v1795 = vmul.f32 %v1779, %v271
  %v1796 = vsub.f32 %v1670, %v1780
  %v1797 = vsub.f32 %v1673, %v1781
  %v1798 = vsub.f32 %v1678, %v1782
  %v1799 = vsub.f32 %v1681, %v1783
  %v1800 = vsub.f32 %v1686, %v1784
  %v1801 = vsub.f32 %v1689, %v1785
  %v1802 = vsub.f32 %v1694, %v1786
  %v1803 = vsub.f32 %v1697, %v1787
  %v1804 = vsub.f32 %v1702, %v1788
  %v1805 = vsub.f32 %v1705, %v1789
  %v1806 = vsub.f32 %v1710, %v1790
  %v1807 = vsub.f32 %v1713, %v1791
  %v1808 = vsub.f32 %v1718, %v1792
  %v1809 = vsub.f32 %v1721, %v1793
  %v1810 = vsub.f32 %v1726, %v1794
  %v1811 = vsub.f32 %v1729, %v1795
  %v1812 = vmul.f32 %v1796, %v1796
  %v1813 = vmul.f32 %v1797, %v1797
  %v1814 = vmul.f32 %v1798, %v1798
  %v1815 = vmul.f32 %v1799, %v1799
  %v1816 = vmul.f32 %v1800, %v1800
  %v1817 = vmul.f32 %v1801, %v1801
  %v1818 = vmul.f32 %v1802, %v1802
  %v1819 = vmul.f32 %v1803, %v1803
  %v1820 = vmul.f32 %v1804, %v1804
  %v1821 = vmul.f32 %v1805, %v1805
  %v1822 = vmul.f32 %v1806, %v1806
  %v1823 = vmul.f32 %v1807, %v1807
  %v1824 = vmul.f32 %v1808, %v1808
  %v1825 = vmul.f32 %v1809, %v1809
  %v1826 = vmul.f32 %v1810, %v1810
  %v1827 = vmul.f32 %v1811, %v1811
  %v1828 = vsel %vm222, %v1812, 0.0
  %1829 = vadd.xlane.f32.xlu0 %v1828
  %v1830 = vpop.xlane.xlu0 %1829
  %v1831 = vsel %vm222, %v1813, 0.0
  %1832 = vadd.xlane.f32.xlu0 %v1831
  %v1833 = vpop.xlane.xlu0 %1832
  %v1834 = vsel %vm222, %v1814, 0.0
  %1835 = vadd.xlane.f32.xlu0 %v1834
  %v1836 = vpop.xlane.xlu0 %1835
  %v1837 = vsel %vm222, %v1815, 0.0
  %1838 = vadd.xlane.f32.xlu0 %v1837
  %v1839 = vpop.xlane.xlu0 %1838
  %v1840 = vsel %vm222, %v1816, 0.0
  %1841 = vadd.xlane.f32.xlu0 %v1840
  %v1842 = vpop.xlane.xlu0 %1841
  %v1843 = vsel %vm222, %v1817, 0.0
  %1844 = vadd.xlane.f32.xlu0 %v1843
  %v1845 = vpop.xlane.xlu0 %1844
  %v1846 = vsel %vm222, %v1818, 0.0
  %1847 = vadd.xlane.f32.xlu0 %v1846
  %v1848 = vpop.xlane.xlu0 %1847
  %v1849 = vsel %vm222, %v1819, 0.0
  %1850 = vadd.xlane.f32.xlu0 %v1849
  %v1851 = vpop.xlane.xlu0 %1850
  %v1852 = vsel %vm222, %v1820, 0.0
  %1853 = vadd.xlane.f32.xlu0 %v1852
  %v1854 = vpop.xlane.xlu0 %1853
  %v1855 = vsel %vm222, %v1821, 0.0
  %1856 = vadd.xlane.f32.xlu0 %v1855
  %v1857 = vpop.xlane.xlu0 %1856
  %v1858 = vsel %vm222, %v1822, 0.0
  %1859 = vadd.xlane.f32.xlu0 %v1858
  %v1860 = vpop.xlane.xlu0 %1859
  %v1861 = vsel %vm222, %v1823, 0.0
  %1862 = vadd.xlane.f32.xlu0 %v1861
  %v1863 = vpop.xlane.xlu0 %1862
  %v1864 = vsel %vm222, %v1824, 0.0
  %1865 = vadd.xlane.f32.xlu0 %v1864
  %v1866 = vpop.xlane.xlu0 %1865
  %v1867 = vsel %vm222, %v1825, 0.0
  %1868 = vadd.xlane.f32.xlu0 %v1867
  %v1869 = vpop.xlane.xlu0 %1868
  %v1870 = vsel %vm222, %v1826, 0.0
  %1871 = vadd.xlane.f32.xlu0 %v1870
  %v1872 = vpop.xlane.xlu0 %1871
  %v1873 = vsel %vm222, %v1827, 0.0
  %1874 = vadd.xlane.f32.xlu0 %v1873
  %v1875 = vpop.xlane.xlu0 %1874
  %v1876 = vmul.f32 %v1830, %v271
  %v1877 = vmul.f32 %v1833, %v271
  %v1878 = vmul.f32 %v1836, %v271
  %v1879 = vmul.f32 %v1839, %v271
  %v1880 = vmul.f32 %v1842, %v271
  %v1881 = vmul.f32 %v1845, %v271
  %v1882 = vmul.f32 %v1848, %v271
  %v1883 = vmul.f32 %v1851, %v271
  %v1884 = vmul.f32 %v1854, %v271
  %v1885 = vmul.f32 %v1857, %v271
  %v1886 = vmul.f32 %v1860, %v271
  %v1887 = vmul.f32 %v1863, %v271
  %v1888 = vmul.f32 %v1866, %v271
  %v1889 = vmul.f32 %v1869, %v271
  %v1890 = vmul.f32 %v1872, %v271
  %v1891 = vmul.f32 %v1875, %v271
  %v1892 = vadd.f32 %v1876, 1e-06
  %v1893 = vadd.f32 %v1877, 1e-06
  %v1894 = vadd.f32 %v1878, 1e-06
  %v1895 = vadd.f32 %v1879, 1e-06
  %v1896 = vadd.f32 %v1880, 1e-06
  %v1897 = vadd.f32 %v1881, 1e-06
  %v1898 = vadd.f32 %v1882, 1e-06
  %v1899 = vadd.f32 %v1883, 1e-06
  %v1900 = vadd.f32 %v1884, 1e-06
  %v1901 = vadd.f32 %v1885, 1e-06
  %v1902 = vadd.f32 %v1886, 1e-06
  %v1903 = vadd.f32 %v1887, 1e-06
  %v1904 = vadd.f32 %v1888, 1e-06
  %v1905 = vadd.f32 %v1889, 1e-06
  %v1906 = vadd.f32 %v1890, 1e-06
  %v1907 = vadd.f32 %v1891, 1e-06
  %v1908 = vrsqrt.pop %v1892
  %v1909 = vrsqrt.pop %v1893
  %v1910 = vrsqrt.pop %v1894
  %v1911 = vrsqrt.pop %v1895
  %v1912 = vrsqrt.pop %v1896
  %v1913 = vrsqrt.pop %v1897
  %v1914 = vrsqrt.pop %v1898
  %v1915 = vrsqrt.pop %v1899
  %v1916 = vrsqrt.pop %v1900
  %v1917 = vrsqrt.pop %v1901
  %v1918 = vrsqrt.pop %v1902
  %v1919 = vrsqrt.pop %v1903
  %v1920 = vrsqrt.pop %v1904
  %v1921 = vrsqrt.pop %v1905
  %v1922 = vrsqrt.pop %v1906
  %v1923 = vrsqrt.pop %v1907
  %v1924 = vmul.f32 %v1796, %v1908
  %v1925 = vmul.f32 %v1797, %v1909
  %v1926 = vmul.f32 %v1798, %v1910
  %v1927 = vmul.f32 %v1799, %v1911
  %v1928 = vmul.f32 %v1800, %v1912
  %v1929 = vmul.f32 %v1801, %v1913
  %v1930 = vmul.f32 %v1802, %v1914
  %v1931 = vmul.f32 %v1803, %v1915
  %v1932 = vmul.f32 %v1804, %v1916
  %v1933 = vmul.f32 %v1805, %v1917
  %v1934 = vmul.f32 %v1806, %v1918
  %v1935 = vmul.f32 %v1807, %v1919
  %v1936 = vmul.f32 %v1808, %v1920
  %v1937 = vmul.f32 %v1809, %v1921
  %v1938 = vmul.f32 %v1810, %v1922
  %v1939 = vmul.f32 %v1811, %v1923
  %v1940 = vmul.f32 %v1924, %v437
  %v1941 = vmul.f32 %v1925, %v437
  %v1942 = vmul.f32 %v1926, %v437
  %v1943 = vmul.f32 %v1927, %v437
  %v1944 = vmul.f32 %v1928, %v437
  %v1945 = vmul.f32 %v1929, %v437
  %v1946 = vmul.f32 %v1930, %v437
  %v1947 = vmul.f32 %v1931, %v437
  %v1948 = vmul.f32 %v1932, %v437
  %v1949 = vmul.f32 %v1933, %v437
  %v1950 = vmul.f32 %v1934, %v437
  %v1951 = vmul.f32 %v1935, %v437
  %v1952 = vmul.f32 %v1936, %v437
  %v1953 = vmul.f32 %v1937, %v437
  %v1954 = vmul.f32 %v1938, %v437
  %v1955 = vmul.f32 %v1939, %v437
  %v1956 = vadd.f32 %v1940, %v460
  %v1957 = vadd.f32 %v1941, %v460
  %v1958 = vadd.f32 %v1942, %v460
  %v1959 = vadd.f32 %v1943, %v460
  %v1960 = vadd.f32 %v1944, %v460
  %v1961 = vadd.f32 %v1945, %v460
  %v1962 = vadd.f32 %v1946, %v460
  %v1963 = vadd.f32 %v1947, %v460
  %v1964 = vadd.f32 %v1948, %v460
  %v1965 = vadd.f32 %v1949, %v460
  %v1966 = vadd.f32 %v1950, %v460
  %v1967 = vadd.f32 %v1951, %v460
  %v1968 = vadd.f32 %v1952, %v460
  %v1969 = vadd.f32 %v1953, %v460
  %v1970 = vadd.f32 %v1954, %v460
  %v1971 = vadd.f32 %v1955, %v460
  %v1972 = vmul.f32 %v1956, 0.5
  %v1973 = vmul.f32 %v1957, 0.5
  %v1974 = vmul.f32 %v1958, 0.5
  %v1975 = vmul.f32 %v1959, 0.5
  %v1976 = vmul.f32 %v1960, 0.5
  %v1977 = vmul.f32 %v1961, 0.5
  %v1978 = vmul.f32 %v1962, 0.5
  %v1979 = vmul.f32 %v1963, 0.5
  %v1980 = vmul.f32 %v1964, 0.5
  %v1981 = vmul.f32 %v1965, 0.5
  %v1982 = vmul.f32 %v1966, 0.5
  %v1983 = vmul.f32 %v1967, 0.5
  %v1984 = vmul.f32 %v1968, 0.5
  %v1985 = vmul.f32 %v1969, 0.5
  %v1986 = vmul.f32 %v1970, 0.5
  %v1987 = vmul.f32 %v1971, 0.5
  %v1988 = vmul.f32 %v1956, 0.044715
  %v1989 = vmul.f32 %v1957, 0.044715
  %v1990 = vmul.f32 %v1958, 0.044715
  %v1991 = vmul.f32 %v1959, 0.044715
  %v1992 = vmul.f32 %v1960, 0.044715
  %v1993 = vmul.f32 %v1961, 0.044715
  %v1994 = vmul.f32 %v1962, 0.044715
  %v1995 = vmul.f32 %v1963, 0.044715
  %v1996 = vmul.f32 %v1964, 0.044715
  %v1997 = vmul.f32 %v1965, 0.044715
  %v1998 = vmul.f32 %v1966, 0.044715
  %v1999 = vmul.f32 %v1967, 0.044715
  %v2000 = vmul.f32 %v1968, 0.044715
  %v2001 = vmul.f32 %v1969, 0.044715
  %v2002 = vmul.f32 %v1970, 0.044715
  %v2003 = vmul.f32 %v1971, 0.044715
  %v2004 = vmul.f32 %v1988, %v1956
  %v2005 = vmul.f32 %v1989, %v1957
  %v2006 = vmul.f32 %v1990, %v1958
  %v2007 = vmul.f32 %v1991, %v1959
  %v2008 = vmul.f32 %v1992, %v1960
  %v2009 = vmul.f32 %v1993, %v1961
  %v2010 = vmul.f32 %v1994, %v1962
  %v2011 = vmul.f32 %v1995, %v1963
  %v2012 = vmul.f32 %v1996, %v1964
  %v2013 = vmul.f32 %v1997, %v1965
  %v2014 = vmul.f32 %v1998, %v1966
  %v2015 = vmul.f32 %v1999, %v1967
  %v2016 = vmul.f32 %v2000, %v1968
  %v2017 = vmul.f32 %v2001, %v1969
  %v2018 = vmul.f32 %v2002, %v1970
  %v2019 = vmul.f32 %v2003, %v1971
  %v2020 = vmul.f32 %v2004, %v1956
  %v2021 = vmul.f32 %v2005, %v1957
  %v2022 = vmul.f32 %v2006, %v1958
  %v2023 = vmul.f32 %v2007, %v1959
  %v2024 = vmul.f32 %v2008, %v1960
  %v2025 = vmul.f32 %v2009, %v1961
  %v2026 = vmul.f32 %v2010, %v1962
  %v2027 = vmul.f32 %v2011, %v1963
  %v2028 = vmul.f32 %v2012, %v1964
  %v2029 = vmul.f32 %v2013, %v1965
  %v2030 = vmul.f32 %v2014, %v1966
  %v2031 = vmul.f32 %v2015, %v1967
  %v2032 = vmul.f32 %v2016, %v1968
  %v2033 = vmul.f32 %v2017, %v1969
  %v2034 = vmul.f32 %v2018, %v1970
  %v2035 = vmul.f32 %v2019, %v1971
  %v2036 = vadd.f32 %v1956, %v2020
  %v2037 = vadd.f32 %v1957, %v2021
  %v2038 = vadd.f32 %v1958, %v2022
  %v2039 = vadd.f32 %v1959, %v2023
  %v2040 = vadd.f32 %v1960, %v2024
  %v2041 = vadd.f32 %v1961, %v2025
  %v2042 = vadd.f32 %v1962, %v2026
  %v2043 = vadd.f32 %v1963, %v2027
  %v2044 = vadd.f32 %v1964, %v2028
  %v2045 = vadd.f32 %v1965, %v2029
  %v2046 = vadd.f32 %v1966, %v2030
  %v2047 = vadd.f32 %v1967, %v2031
  %v2048 = vadd.f32 %v1968, %v2032
  %v2049 = vadd.f32 %v1969, %v2033
  %v2050 = vadd.f32 %v1970, %v2034
  %v2051 = vadd.f32 %v1971, %v2035
  %v2052 = vmul.f32 %v2036, 0.7978846
  %v2053 = vmul.f32 %v2037, 0.7978846
  %v2054 = vmul.f32 %v2038, 0.7978846
  %v2055 = vmul.f32 %v2039, 0.7978846
  %v2056 = vmul.f32 %v2040, 0.7978846
  %v2057 = vmul.f32 %v2041, 0.7978846
  %v2058 = vmul.f32 %v2042, 0.7978846
  %v2059 = vmul.f32 %v2043, 0.7978846
  %v2060 = vmul.f32 %v2044, 0.7978846
  %v2061 = vmul.f32 %v2045, 0.7978846
  %v2062 = vmul.f32 %v2046, 0.7978846
  %v2063 = vmul.f32 %v2047, 0.7978846
  %v2064 = vmul.f32 %v2048, 0.7978846
  %v2065 = vmul.f32 %v2049, 0.7978846
  %v2066 = vmul.f32 %v2050, 0.7978846
  %v2067 = vmul.f32 %v2051, 0.7978846
  %v2068 = vtanh.pop %v2052
  %v2069 = vtanh.pop %v2053
  %v2070 = vtanh.pop %v2054
  %v2071 = vtanh.pop %v2055
  %v2072 = vtanh.pop %v2056
  %v2073 = vtanh.pop %v2057
  %v2074 = vtanh.pop %v2058
  %v2075 = vtanh.pop %v2059
  %v2076 = vtanh.pop %v2060
  %v2077 = vtanh.pop %v2061
  %v2078 = vtanh.pop %v2062
  %v2079 = vtanh.pop %v2063
  %v2080 = vtanh.pop %v2064
  %v2081 = vtanh.pop %v2065
  %v2082 = vtanh.pop %v2066
  %v2083 = vtanh.pop %v2067
  %v2084 = vadd.f32 %v2068, 1.0
  %v2085 = vadd.f32 %v2069, 1.0
  %v2086 = vadd.f32 %v2070, 1.0
  %v2087 = vadd.f32 %v2071, 1.0
  %v2088 = vadd.f32 %v2072, 1.0
  %v2089 = vadd.f32 %v2073, 1.0
  %v2090 = vadd.f32 %v2074, 1.0
  %v2091 = vadd.f32 %v2075, 1.0
  %v2092 = vadd.f32 %v2076, 1.0
  %v2093 = vadd.f32 %v2077, 1.0
  %v2094 = vadd.f32 %v2078, 1.0
  %v2095 = vadd.f32 %v2079, 1.0
  %v2096 = vadd.f32 %v2080, 1.0
  %v2097 = vadd.f32 %v2081, 1.0
  %v2098 = vadd.f32 %v2082, 1.0
  %v2099 = vadd.f32 %v2083, 1.0
  %v2100 = vmul.f32 %v1972, %v2084
  %v2101 = vmul.f32 %v1973, %v2085
  %v2102 = vmul.f32 %v1974, %v2086
  %v2103 = vmul.f32 %v1975, %v2087
  %v2104 = vmul.f32 %v1976, %v2088
  %v2105 = vmul.f32 %v1977, %v2089
  %v2106 = vmul.f32 %v1978, %v2090
  %v2107 = vmul.f32 %v1979, %v2091
  %v2108 = vmul.f32 %v1980, %v2092
  %v2109 = vmul.f32 %v1981, %v2093
  %v2110 = vmul.f32 %v1982, %v2094
  %v2111 = vmul.f32 %v1983, %v2095
  %v2112 = vmul.f32 %v1984, %v2096
  %v2113 = vmul.f32 %v1985, %v2097
  %v2114 = vmul.f32 %v1986, %v2098
  %v2115 = vmul.f32 %v1987, %v2099
  %2132 = vrot.lane.b32.xlu0 %v1104, 8
  %v2133 = vpop.permute.xlu0 %2132
  %2134 = vrot.lane.b32.xlu0 %v1105, 8
  %v2135 = vpop.permute.xlu0 %2134
  %2136 = vrot.lane.b32.xlu0 %v1106, 8
  %v2137 = vpop.permute.xlu0 %2136
  %2138 = vrot.lane.b32.xlu0 %v1107, 8
  %v2139 = vpop.permute.xlu0 %2138
  %2140 = vrot.lane.b32.xlu0 %v1108, 8
  %v2141 = vpop.permute.xlu0 %2140
  %2142 = vrot.lane.b32.xlu0 %v1109, 8
  %v2143 = vpop.permute.xlu0 %2142
  %2144 = vrot.lane.b32.xlu0 %v1110, 8
  %v2145 = vpop.permute.xlu0 %2144
  %2146 = vrot.lane.b32.xlu0 %v1111, 8
  %v2147 = vpop.permute.xlu0 %2146
  %2148 = vrot.lane.b32.xlu0 %v1112, 8
  %v2149 = vpop.permute.xlu0 %2148
  %2150 = vrot.lane.b32.xlu0 %v1113, 8
  %v2151 = vpop.permute.xlu0 %2150
  %2152 = vrot.lane.b32.xlu0 %v1114, 8
  %v2153 = vpop.permute.xlu0 %2152
  %2154 = vrot.lane.b32.xlu0 %v1115, 8
  %v2155 = vpop.permute.xlu0 %2154
  %2156 = vrot.lane.b32.xlu0 %v1116, 8
  %v2157 = vpop.permute.xlu0 %2156
  %2158 = vrot.lane.b32.xlu0 %v1117, 8
  %v2159 = vpop.permute.xlu0 %2158
  %2160 = vrot.lane.b32.xlu0 %v1118, 8
  %v2161 = vpop.permute.xlu0 %2160
  %2162 = vrot.lane.b32.xlu0 %v1119, 8
  %v2163 = vpop.permute.xlu0 %2162
  %2196 = vrot.lane.b32.xlu0 %v1602, 16
  %v2197 = vpop.permute.xlu0 %2196
  %2198 = vrot.lane.b32.xlu0 %v1603, 16
  %v2199 = vpop.permute.xlu0 %2198
  %2200 = vrot.lane.b32.xlu0 %v1604, 16
  %v2201 = vpop.permute.xlu0 %2200
  %2202 = vrot.lane.b32.xlu0 %v1605, 16
  %v2203 = vpop.permute.xlu0 %2202
  %2204 = vrot.lane.b32.xlu0 %v1606, 16
  %v2205 = vpop.permute.xlu0 %2204
  %2206 = vrot.lane.b32.xlu0 %v1607, 16
  %v2207 = vpop.permute.xlu0 %2206
  %2208 = vrot.lane.b32.xlu0 %v1608, 16
  %v2209 = vpop.permute.xlu0 %2208
  %2210 = vrot.lane.b32.xlu0 %v1609, 16
  %v2211 = vpop.permute.xlu0 %2210
  %2212 = vrot.lane.b32.xlu0 %v1610, 16
  %v2213 = vpop.permute.xlu0 %2212
  %2214 = vrot.lane.b32.xlu0 %v1611, 16
  %v2215 = vpop.permute.xlu0 %2214
  %2216 = vrot.lane.b32.xlu0 %v1612, 16
  %v2217 = vpop.permute.xlu0 %2216
  %2218 = vrot.lane.b32.xlu0 %v1613, 16
  %v2219 = vpop.permute.xlu0 %2218
  %2220 = vrot.lane.b32.xlu0 %v1614, 16
  %v2221 = vpop.permute.xlu0 %2220
  %2222 = vrot.lane.b32.xlu0 %v1615, 16
  %v2223 = vpop.permute.xlu0 %2222
  %2224 = vrot.lane.b32.xlu0 %v1616, 16
  %v2225 = vpop.permute.xlu0 %2224
  %2226 = vrot.lane.b32.xlu0 %v1617, 16
  %v2227 = vpop.permute.xlu0 %2226
  %2260 = vrot.lane.b32.xlu0 %v2100, 24
  %v2261 = vpop.permute.xlu0 %2260
  %2262 = vrot.lane.b32.xlu0 %v2101, 24
  %v2263 = vpop.permute.xlu0 %2262
  %2264 = vrot.lane.b32.xlu0 %v2102, 24
  %v2265 = vpop.permute.xlu0 %2264
  %2266 = vrot.lane.b32.xlu0 %v2103, 24
  %v2267 = vpop.permute.xlu0 %2266
  %2268 = vrot.lane.b32.xlu0 %v2104, 24
  %v2269 = vpop.permute.xlu0 %2268
  %2270 = vrot.lane.b32.xlu0 %v2105, 24
  %v2271 = vpop.permute.xlu0 %2270
  %2272 = vrot.lane.b32.xlu0 %v2106, 24
  %v2273 = vpop.permute.xlu0 %2272
  %2274 = vrot.lane.b32.xlu0 %v2107, 24
  %v2275 = vpop.permute.xlu0 %2274
  %2276 = vrot.lane.b32.xlu0 %v2108, 24
  %v2277 = vpop.permute.xlu0 %2276
  %2278 = vrot.lane.b32.xlu0 %v2109, 24
  %v2279 = vpop.permute.xlu0 %2278
  %2280 = vrot.lane.b32.xlu0 %v2110, 24
  %v2281 = vpop.permute.xlu0 %2280
  %2282 = vrot.lane.b32.xlu0 %v2111, 24
  %v2283 = vpop.permute.xlu0 %2282
  %2284 = vrot.lane.b32.xlu0 %v2112, 24
  %v2285 = vpop.permute.xlu0 %2284
  %2286 = vrot.lane.b32.xlu0 %v2113, 24
  %v2287 = vpop.permute.xlu0 %2286
  %2288 = vrot.lane.b32.xlu0 %v2114, 24
  %v2289 = vpop.permute.xlu0 %2288
  %2290 = vrot.lane.b32.xlu0 %v2115, 24
  %v2291 = vpop.permute.xlu0 %2290
  %v2308 = vsel %vm222, %v606, %v2133
  %v2309 = vsel %vm222, %v607, %v2135
  %v2310 = vsel %vm222, %v608, %v2137
  %v2311 = vsel %vm222, %v609, %v2139
  %v2312 = vsel %vm222, %v610, %v2141
  %v2313 = vsel %vm222, %v611, %v2143
  %v2314 = vsel %vm222, %v612, %v2145
  %v2315 = vsel %vm222, %v613, %v2147
  %v2316 = vsel %vm222, %v614, %v2149
  %v2317 = vsel %vm222, %v615, %v2151
  %v2318 = vsel %vm222, %v616, %v2153
  %v2319 = vsel %vm222, %v617, %v2155
  %v2320 = vsel %vm222, %v618, %v2157
  %v2321 = vsel %vm222, %v619, %v2159
  %v2322 = vsel %vm222, %v620, %v2161
  %v2323 = vsel %vm222, %v621, %v2163
  %vm2324 = vcmask 130048
  %v2325 = vsel %vm2324, %v2308, %v2197
  %v2326 = vsel %vm2324, %v2309, %v2199
  %v2327 = vsel %vm2324, %v2310, %v2201
  %v2328 = vsel %vm2324, %v2311, %v2203
  %v2329 = vsel %vm2324, %v2312, %v2205
  %v2330 = vsel %vm2324, %v2313, %v2207
  %v2331 = vsel %vm2324, %v2314, %v2209
  %v2332 = vsel %vm2324, %v2315, %v2211
  %v2333 = vsel %vm2324, %v2316, %v2213
  %v2334 = vsel %vm2324, %v2317, %v2215
  %v2335 = vsel %vm2324, %v2318, %v2217
  %v2336 = vsel %vm2324, %v2319, %v2219
  %v2337 = vsel %vm2324, %v2320, %v2221
  %v2338 = vsel %vm2324, %v2321, %v2223
  %v2339 = vsel %vm2324, %v2322, %v2225
  %v2340 = vsel %vm2324, %v2323, %v2227
  %vm2341 = vcmask 195584
  %v2342 = vsel %vm2341, %v2325, %v2261
  %v2343 = vsel %vm2341, %v2326, %v2263
  %v2344 = vsel %vm2341, %v2327, %v2265
  %v2345 = vsel %vm2341, %v2328, %v2267
  %v2346 = vsel %vm2341, %v2329, %v2269
  %v2347 = vsel %vm2341, %v2330, %v2271
  %v2348 = vsel %vm2341, %v2331, %v2273
  %v2349 = vsel %vm2341, %v2332, %v2275
  %v2350 = vsel %vm2341, %v2333, %v2277
  %v2351 = vsel %vm2341, %v2334, %v2279
  %v2352 = vsel %vm2341, %v2335, %v2281
  %v2353 = vsel %vm2341, %v2336, %v2283
  %v2354 = vsel %vm2341, %v2337, %v2285
  %v2355 = vsel %vm2341, %v2338, %v2287
  %v2356 = vsel %vm2341, %v2339, %v2289
  %v2357 = vsel %vm2341, %v2340, %v2291
  %v2358 = vpack.c.bf16 %v2343, %v2342
  %v2359 = vpack.c.bf16 %v2345, %v2344
  %v2360 = vpack.c.bf16 %v2347, %v2346
  %v2361 = vpack.c.bf16 %v2349, %v2348
  %v2362 = vpack.c.bf16 %v2351, %v2350
  %v2363 = vpack.c.bf16 %v2353, %v2352
  %v2364 = vpack.c.bf16 %v2355, %v2354
  %v2365 = vpack.c.bf16 %v2357, %v2356
  %v2374 = vunpack.c.l.b16 %v2358
  %v2375 = vunpack.c.h.b16 %v2358
  %v2376 = vunpack.c.l.b16 %v2359
  %v2377 = vunpack.c.h.b16 %v2359
  %v2378 = vunpack.c.l.b16 %v2360
  %v2379 = vunpack.c.h.b16 %v2360
  %v2380 = vunpack.c.l.b16 %v2361
  %v2381 = vunpack.c.h.b16 %v2361
  %v2382 = vunpack.c.l.b16 %v2362
  %v2383 = vunpack.c.h.b16 %v2362
  %v2384 = vunpack.c.l.b16 %v2363
  %v2385 = vunpack.c.h.b16 %v2363
  %v2386 = vunpack.c.l.b16 %v2364
  %v2387 = vunpack.c.h.b16 %v2364
  %v2388 = vunpack.c.l.b16 %v2365
  %v2389 = vunpack.c.h.b16 %v2365
  %v2390 = vpack.c.b16 %v2374, %v2374
  %v2391 = vpack.c.b16 %v2375, %v2375
  %v2392 = vpack.c.b16 %v2376, %v2376
  %v2393 = vpack.c.b16 %v2377, %v2377
  %v2394 = vpack.c.b16 %v2378, %v2378
  %v2395 = vpack.c.b16 %v2379, %v2379
  %v2396 = vpack.c.b16 %v2380, %v2380
  %v2397 = vpack.c.b16 %v2381, %v2381
  %v2398 = vpack.c.b16 %v2382, %v2382
  %v2399 = vpack.c.b16 %v2383, %v2383
  %v2400 = vpack.c.b16 %v2384, %v2384
  %v2401 = vpack.c.b16 %v2385, %v2385
  %v2402 = vpack.c.b16 %v2386, %v2386
  %v2403 = vpack.c.b16 %v2387, %v2387
  %v2404 = vpack.c.b16 %v2388, %v2388
  %v2405 = vpack.c.b16 %v2389, %v2389
  %vm2422 = vcmask 257024
  %2423 = vst.msk [vmem:[%s5] sm:$0xf] %vm2422, %v2390
  %2424 = vst.msk [vmem:[%s5 + $0x4] sm:$0xf] %vm2422, %v2391
  %2425 = vst.msk [vmem:[%s5 + $0x8] sm:$0xf] %vm2422, %v2392
  %2426 = vst.msk [vmem:[%s5 + $0xc] sm:$0xf] %vm2422, %v2393
  %2427 = vst.msk [vmem:[%s5 + $0x10] sm:$0xf] %vm2422, %v2394
  %2428 = vst.msk [vmem:[%s5 + $0x14] sm:$0xf] %vm2422, %v2395
  %2429 = vst.msk [vmem:[%s5 + $0x18] sm:$0xf] %vm2422, %v2396
  %2430 = vst.msk [vmem:[%s5 + $0x1c] sm:$0xf] %vm2422, %v2397
  %2431 = vst.msk [vmem:[%s5 + $0x20] sm:$0xf] %vm2422, %v2398
  %2432 = vst.msk [vmem:[%s5 + $0x24] sm:$0xf] %vm2422, %v2399
  %2433 = vst.msk [vmem:[%s5 + $0x28] sm:$0xf] %vm2422, %v2400
  %2434 = vst.msk [vmem:[%s5 + $0x2c] sm:$0xf] %vm2422, %v2401
  %2435 = vst.msk [vmem:[%s5 + $0x30] sm:$0xf] %vm2422, %v2402
  %2436 = vst.msk [vmem:[%s5 + $0x34] sm:$0xf] %vm2422, %v2403
  %2437 = vst.msk [vmem:[%s5 + $0x38] sm:$0xf] %vm2422, %v2404
  %2438 = vst.msk [vmem:[%s5 + $0x3c] sm:$0xf] %vm2422, %v2405
  // Predicated region
  $region22: #{tpu_custom_call.1} parent=0 // pred_check
    _
  $region23: #{tpu_custom_call.1} parent=0 // pred_check_branch
    %2440 = sbr.rel (0) target = $region25
  $region24: #{tpu_custom_call.1} parent=0 // pred_region
    _
  $region25: #{tpu_custom_call.1} parent=0 // pred_fallthru
    _
  // Predicated region
  $region26: #{tpu_custom_call.1} parent=0 // pred_check
    _
  $region27: #{tpu_custom_call.1} parent=0 // pred_check_branch
    %2442 = sbr.rel (0) target = $region29
  $region28: #{tpu_custom_call.1} parent=0 // pred_region
    _
  $region29: #{tpu_custom_call.1} parent=0 // pred_fallthru
    _

</llo_original>
